<compile_context>
chip_gen: v6e
topology: v6e:2x2x1
jax: 0.10.0
libtpu: 0.0.40
codegen_flags: <defaults>
</compile_context>

<pallas_src>
import functools

import jax
import jax.numpy as jnp
from jax.experimental import pallas as pl
from jax.experimental.pallas import tpu as pltpu


def _round_up(n, m):
    return ((n + m - 1) // m) * m


def _pick_tile_h(hh, wp8, cin, np_, budget_bytes=10 << 20):
    """Largest row tile whose (double-buffered) VMEM use fits the budget."""
    th = max(1, min(64, hh))
    while th > 1:
        m = th * wp8
        r_in = (th + 3) * wp8
        usage = (2 * r_in * cin * 2          # input slab, bf16, double-buffered
                 + 2 * 9 * cin * np_ * 2     # resident weights (worst-case 2 buffers)
                 + 2 * m * np_ * 2           # output slab, bf16, double-buffered
                 + m * np_ * 4)              # f32 accumulator scratch
        if usage <= budget_bytes:
            break
        th //= 2
    return th


# ----------------------------------------------------------------------------
# Pallas kernel: fused 3x3 conv (9 tap-shifted MXU dots) + BN shift + SiLU
# ----------------------------------------------------------------------------

def _spd_conv3x3_bn_silu_kernel(xp_ref, w_ref, shift_ref, o_ref, acc_ref, *, wp):
    """One (TILE_H x wp)-row slab of one image per grid step.

    xp_ref:    ((TILE_H+3)*wp, cin) bf16  flattened zero-padded SPD rows (incl. halo)
    w_ref:     (9, cin, Np)         bf16  tap-major weights, BN scale pre-folded
    shift_ref: (1, Np)              f32   fused BN shift
    o_ref:     (TILE_H*wp, Np)      bf16  output rows (junk cols j >= Wh sliced outside)
    acc_ref:   (TILE_H*wp, Np)      f32   VMEM accumulator scratch
    """
    m = o_ref.shape[0]
    # In-VMEM "im2col": each 3x3 tap is a contiguous row-shifted window of the
    # flattened padded slab -> 9 (M, cin) x (cin, Np) MXU dots into the f32 scratch.
    acc_ref[...] = jnp.dot(xp_ref[0:m, :], w_ref[0],
                           preferred_element_type=jnp.float32)
    for tap in range(1, 9):
        ky, kx = divmod(tap, 3)
        off = ky * wp + kx                       # static row offset of this tap
        acc_ref[...] += jnp.dot(xp_ref[off:off + m, :], w_ref[tap],
                                preferred_element_type=jnp.float32)
    # Fused BatchNorm shift + SiLU epilogue (scale already folded into the weights).
    y = acc_ref[...] + shift_ref[...]
    o_ref[...] = (y * jax.nn.sigmoid(y)).astype(o_ref.dtype)


# ----------------------------------------------------------------------------
# JAX wrapper (layout plumbing + pallas_call)
# ----------------------------------------------------------------------------

def _bn_affine(bn):
    # TODO(synk): BatchNorm uses inference-mode running stats; training-mode batch
    # statistics are not implemented.
    scale = bn["gamma"] * jax.lax.rsqrt(bn["var"] + bn["eps"])
    shift = bn["beta"] - bn["mean"] * scale
    return scale, shift


def spdconv1_forward(x_nchw, params, out_layout="NCHW"):
    w = params["conv_w"]                         # (ouc, 4*inc, 3, 3) OIHW
    B, C, H, W = x_nchw.shape
    ouc, cin = w.shape[0], w.shape[1]
    assert cin == 4 * C and H % 2 == 0 and W % 2 == 0
    Hh, Wh = H // 2, W // 2
    wp8 = _round_up(Wh + 2, 8)                   # padded, sublane-aligned row width
    Np = _round_up(ouc, 128)                     # lane-dense output channels

    th0 = _pick_tile_h(Hh, wp8, cin, Np)
    n_tiles = (Hh + th0 - 1) // th0
    tile_h = (Hh + n_tiles - 1) // n_tiles       # balance tiles, minimise junk rows
    hh_pad = n_tiles * tile_h                    # padded number of output rows
    hp = hh_pad + 3                              # padded input rows (1 top + >=2 bottom)
    r_in = (tile_h + 3) * wp8                    # flattened input rows per tile (w/ halo)
    m = tile_h * wp8                             # flattened output rows per tile

    # --- input plumbing: bf16 cast + full-res zero pad + ONE reshape/transpose ---
    # Padding the half-res SPD image by (1 top / 1 left / k bottom / k right) is the same
    # as zero-padding x by twice that much in full resolution before space-to-depth.
    xb = x_nchw.astype(jnp.bfloat16)
    xpad = jnp.pad(xb, ((0, 0), (0, 0),
                        (2, 2 * (hp - 1 - Hh)),
                        (2, 2 * (wp8 - 1 - Wh))))
    # torch channel-cat order ((0,0),(1,0),(0,1),(1,1)) -> channel = (2*wq + hq)*C + c
    x6 = xpad.reshape(B, C, hp, 2, wp8, 2)
    pimg = jnp.transpose(x6, (0, 2, 4, 5, 3, 1)).reshape(B, hp, wp8, cin)

    # Overlapping row tiles (3-row halo) materialised once so plain blocked BlockSpecs
    # can tile them without overlap.
    if n_tiles == 1:
        xtiles = pimg.reshape(B, 1, r_in, cin)
    else:
        rows = (jnp.arange(n_tiles)[:, None] * tile_h
                + jnp.arange(tile_h + 3)[None, :]).reshape(-1)
        xtiles = jnp.take(pimg, rows, axis=1).reshape(B, n_tiles, r_in, cin)

    # --- weights: tap-major, BN scale folded in, Cout padded to Np, bf16 ---
    scale, shift = _bn_affine(params["bn"])
    w3 = jnp.transpose(w, (2, 3, 1, 0)).reshape(9, cin, ouc)     # (ky,kx)-major taps
    w3 = (w3 * scale[None, None, :]).astype(jnp.bfloat16)
    w3 = jnp.pad(w3, ((0, 0), (0, 0), (0, Np - ouc)))
    shift_p = jnp.pad(shift, (0, Np - ouc)).reshape(1, Np).astype(jnp.float32)

    out = pl.pallas_call(
        functools.partial(_spd_conv3x3_bn_silu_kernel, wp=wp8),
        out_shape=jax.ShapeDtypeStruct((B, n_tiles, m, Np), jnp.bfloat16),
        grid=(B, n_tiles),
        in_specs=[
            pl.BlockSpec((None, None, r_in, cin), lambda b, t: (b, t, 0, 0)),
            pl.BlockSpec((9, cin, Np), lambda b, t: (0, 0, 0)),   # resident weights
            pl.BlockSpec((1, Np), lambda b, t: (0, 0)),           # resident BN shift
        ],
        out_specs=pl.BlockSpec((None, None, m, Np), lambda b, t: (b, t, 0, 0)),
        scratch_shapes=[pltpu.VMEM((m, Np), jnp.float32)],
        compiler_params=pltpu.CompilerParams(
            dimension_semantics=("parallel", "parallel")),
    )(xtiles, w3, shift_p)

    # --- drop junk columns / padded rows / padded channels ---
    y = out.reshape(B, hh_pad, wp8, Np)[:, :Hh, :Wh, :ouc]
    if out_layout == "NHWC":
        return y                                  # lane-dense, no extra relayout copy
    return jnp.transpose(y, (0, 3, 1, 2))         # NCHW, matches the PyTorch module


# ----------------------------------------------------------------------------
# Pure-JAX f32 reference (independent of the kernel's layout tricks) + params
# ----------------------------------------------------------------------------

def spdconv1_reference(x_nchw, params):
    spd = jnp.concatenate(
        [x_nchw[:, :, 0::2, 0::2], x_nchw[:, :, 1::2, 0::2],
         x_nchw[:, :, 0::2, 1::2], x_nchw[:, :, 1::2, 1::2]], axis=1)
    y = jax.lax.conv_general_dilated(
        spd, params["conv_w"], window_strides=(1, 1), padding=((1, 1), (1, 1)),
        dimension_numbers=("NCHW", "OIHW", "NCHW"))
    scale, shift = _bn_affine(params["bn"])
    y = y * scale[None, :, None, None] + shift[None, :, None, None]
    return y * jax.nn.sigmoid(y)


def init_params(key, inc, ouc):
    cin = 4 * inc
    k1, k2, k3, k4, k5 = jax.random.split(key, 5)
    return dict(
        conv_w=(0.05 * jax.random.normal(k1, (ouc, cin, 3, 3))).astype(jnp.float32),
        bn=dict(
            gamma=(1.0 + 0.1 * jax.random.normal(k2, (ouc,))).astype(jnp.float32),
            beta=(0.1 * jax.random.normal(k3, (ouc,))).astype(jnp.float32),
            mean=(0.1 * jax.random.normal(k4, (ouc,))).astype(jnp.float32),
            var=(1.0 + 0.1 * jax.random.uniform(k5, (ouc,))).astype(jnp.float32),
            eps=1e-5,
        ),
    )


if __name__ == "__main__":
    inc, ouc = 4, 32
    B, H, W = 2, 16, 16
    key = jax.random.PRNGKey(0)
    k_x, k_p = jax.random.split(key)
    x = jax.random.normal(k_x, (B, inc, H, W), dtype=jnp.float32)
    params = init_params(k_p, inc, ouc)

    fwd = jax.jit(spdconv1_forward)
    out = jax.block_until_ready(fwd(x, params))

    assert out.shape == (B, ouc, H // 2, W // 2), out.shape
    out_f32 = out.astype(jnp.float32)
    assert bool(jnp.all(jnp.isfinite(out_f32)))

    # Self-check vs. the f32 XLA reference (kernel uses bf16 matmul inputs/outputs).
    ref = spdconv1_reference(x, params)
    err = float(jnp.max(jnp.abs(out_f32 - ref)))
    assert err < 5e-2, err

    print("KERNEL_OK")
</pallas_src>

<mosaic_0001>
module attributes {stable_mosaic.version = 11 : i64} {
  func.func @_spd_conv3x3_bn_silu_kernel(%arg0: i32, %arg1: i32, %arg2: memref<1x1x176x16xbf16, #tpu.memory_space<vmem>>, %arg3: memref<9x16x128xbf16, #tpu.memory_space<vmem>>, %arg4: memref<1x128xf32, #tpu.memory_space<vmem>>, %arg5: memref<1x1x128x128xbf16, #tpu.memory_space<vmem>>, %arg6: memref<128x128xf32, #tpu.memory_space<vmem>>) attributes {dimension_semantics = [#tpu.dimension_semantics<parallel>, #tpu.dimension_semantics<parallel>], iteration_bounds = array<i64: 2, 1>, scalar_prefetch = 0 : i64, scratch_operands = 1 : i64, tpu.core_type = #tpu.core_type<tc>, window_params = [{transform_indices = @transform_0, window_bounds = array<i64: 1, 1, 176, 16>}, {pipeline_mode = #tpu.pipeline_mode<synchronous>, transform_indices = @transform_1, window_bounds = array<i64: 9, 16, 128>}, {pipeline_mode = #tpu.pipeline_mode<synchronous>, transform_indices = @transform_2, window_bounds = array<i64: 1, 128>}, {transform_indices = @transform_3, window_bounds = array<i64: 1, 1, 128, 128>}]} {
    %c0 = arith.constant 0 : index
    %c0_0 = arith.constant 0 : index
    %c0_1 = arith.constant 0 : index
    %c0_2 = arith.constant 0 : index
    %0 = vector.load %arg2[%c0, %c0_0, %c0_1, %c0_2] : memref<1x1x176x16xbf16, #tpu.memory_space<vmem>>, vector<1x1x128x16xbf16>
    %1 = vector.shape_cast %0 : vector<1x1x128x16xbf16> to vector<128x16xbf16>
    %c0_3 = arith.constant 0 : index
    %c0_4 = arith.constant 0 : index
    %c0_5 = arith.constant 0 : index
    %2 = vector.load %arg3[%c0_3, %c0_4, %c0_5] : memref<9x16x128xbf16, #tpu.memory_space<vmem>>, vector<1x16x128xbf16>
    %3 = vector.shape_cast %2 : vector<1x16x128xbf16> to vector<16x128xbf16>
    %cst = arith.constant dense<0.000000e+00> : vector<128x128xf32>
    %4 = tpu.matmul %1, %3, %cst {dimension_numbers = #tpu.dot_dimension_numbers<[1], [0], [0], [1], [0, 0, 1, 1], [], []>} : vector<128x16xbf16>, vector<16x128xbf16>, vector<128x128xf32> -> vector<128x128xf32>
    %c0_6 = arith.constant 0 : index
    %c0_7 = arith.constant 0 : index
    %5 = vector.load %arg6[%c0_6, %c0_7] : memref<128x128xf32, #tpu.memory_space<vmem>>, vector<128x128xf32>
    tpu.vector_store %arg6[%c0_6, %c0_7], %4 {strides = array<i32>} : memref<128x128xf32, #tpu.memory_space<vmem>>, vector<128x128xf32>,
    %c0_8 = arith.constant 0 : index
    %c0_9 = arith.constant 0 : index
    %6 = vector.load %arg6[%c0_8, %c0_9] : memref<128x128xf32, #tpu.memory_space<vmem>>, vector<128x128xf32>
    %c0_10 = arith.constant 0 : index
    %c0_11 = arith.constant 0 : index
    %c1 = arith.constant 1 : index
    %c0_12 = arith.constant 0 : index
    %7 = vector.load %arg2[%c0_10, %c0_11, %c1, %c0_12] : memref<1x1x176x16xbf16, #tpu.memory_space<vmem>>, vector<1x1x128x16xbf16>
    %8 = vector.shape_cast %7 : vector<1x1x128x16xbf16> to vector<128x16xbf16>
    %c1_13 = arith.constant 1 : index
    %c0_14 = arith.constant 0 : index
    %c0_15 = arith.constant 0 : index
    %9 = vector.load %arg3[%c1_13, %c0_14, %c0_15] : memref<9x16x128xbf16, #tpu.memory_space<vmem>>, vector<1x16x128xbf16>
    %10 = vector.shape_cast %9 : vector<1x16x128xbf16> to vector<16x128xbf16>
    %cst_16 = arith.constant dense<0.000000e+00> : vector<128x128xf32>
    %11 = tpu.matmul %8, %10, %cst_16 {dimension_numbers = #tpu.dot_dimension_numbers<[1], [0], [0], [1], [0, 0, 1, 1], [], []>} : vector<128x16xbf16>, vector<16x128xbf16>, vector<128x128xf32> -> vector<128x128xf32>
    %12 = arith.addf %6, %11 : vector<128x128xf32>
    %c0_17 = arith.constant 0 : index
    %c0_18 = arith.constant 0 : index
    %13 = vector.load %arg6[%c0_17, %c0_18] : memref<128x128xf32, #tpu.memory_space<vmem>>, vector<128x128xf32>
    tpu.vector_store %arg6[%c0_17, %c0_18], %12 {strides = array<i32>} : memref<128x128xf32, #tpu.memory_space<vmem>>, vector<128x128xf32>,
    %c0_19 = arith.constant 0 : index
    %c0_20 = arith.constant 0 : index
    %14 = vector.load %arg6[%c0_19, %c0_20] : memref<128x128xf32, #tpu.memory_space<vmem>>, vector<128x128xf32>
    %c0_21 = arith.constant 0 : index
    %c0_22 = arith.constant 0 : index
    %c2 = arith.constant 2 : index
    %c0_23 = arith.constant 0 : index
    %15 = vector.load %arg2[%c0_21, %c0_22, %c2, %c0_23] : memref<1x1x176x16xbf16, #tpu.memory_space<vmem>>, vector<1x1x128x16xbf16>
    %16 = vector.shape_cast %15 : vector<1x1x128x16xbf16> to vector<128x16xbf16>
    %c2_24 = arith.constant 2 : index
    %c0_25 = arith.constant 0 : index
    %c0_26 = arith.constant 0 : index
    %17 = vector.load %arg3[%c2_24, %c0_25, %c0_26] : memref<9x16x128xbf16, #tpu.memory_space<vmem>>, vector<1x16x128xbf16>
    %18 = vector.shape_cast %17 : vector<1x16x128xbf16> to vector<16x128xbf16>
    %cst_27 = arith.constant dense<0.000000e+00> : vector<128x128xf32>
    %19 = tpu.matmul %16, %18, %cst_27 {dimension_numbers = #tpu.dot_dimension_numbers<[1], [0], [0], [1], [0, 0, 1, 1], [], []>} : vector<128x16xbf16>, vector<16x128xbf16>, vector<128x128xf32> -> vector<128x128xf32>
    %20 = arith.addf %14, %19 : vector<128x128xf32>
    %c0_28 = arith.constant 0 : index
    %c0_29 = arith.constant 0 : index
    %21 = vector.load %arg6[%c0_28, %c0_29] : memref<128x128xf32, #tpu.memory_space<vmem>>, vector<128x128xf32>
    tpu.vector_store %arg6[%c0_28, %c0_29], %20 {strides = array<i32>} : memref<128x128xf32, #tpu.memory_space<vmem>>, vector<128x128xf32>,
    %c0_30 = arith.constant 0 : index
    %c0_31 = arith.constant 0 : index
    %22 = vector.load %arg6[%c0_30, %c0_31] : memref<128x128xf32, #tpu.memory_space<vmem>>, vector<128x128xf32>
    %c0_32 = arith.constant 0 : index
    %c0_33 = arith.constant 0 : index
    %c16 = arith.constant 16 : index
    %c0_34 = arith.constant 0 : index
    %23 = vector.load %arg2[%c0_32, %c0_33, %c16, %c0_34] : memref<1x1x176x16xbf16, #tpu.memory_space<vmem>>, vector<1x1x128x16xbf16>
    %24 = vector.shape_cast %23 : vector<1x1x128x16xbf16> to vector<128x16xbf16>
    %c3 = arith.constant 3 : index
    %c0_35 = arith.constant 0 : index
    %c0_36 = arith.constant 0 : index
    %25 = vector.load %arg3[%c3, %c0_35, %c0_36] : memref<9x16x128xbf16, #tpu.memory_space<vmem>>, vector<1x16x128xbf16>
    %26 = vector.shape_cast %25 : vector<1x16x128xbf16> to vector<16x128xbf16>
    %cst_37 = arith.constant dense<0.000000e+00> : vector<128x128xf32>
    %27 = tpu.matmul %24, %26, %cst_37 {dimension_numbers = #tpu.dot_dimension_numbers<[1], [0], [0], [1], [0, 0, 1, 1], [], []>} : vector<128x16xbf16>, vector<16x128xbf16>, vector<128x128xf32> -> vector<128x128xf32>
    %28 = arith.addf %22, %27 : vector<128x128xf32>
    %c0_38 = arith.constant 0 : index
    %c0_39 = arith.constant 0 : index
    %29 = vector.load %arg6[%c0_38, %c0_39] : memref<128x128xf32, #tpu.memory_space<vmem>>, vector<128x128xf32>
    tpu.vector_store %arg6[%c0_38, %c0_39], %28 {strides = array<i32>} : memref<128x128xf32, #tpu.memory_space<vmem>>, vector<128x128xf32>,
    %c0_40 = arith.constant 0 : index
    %c0_41 = arith.constant 0 : index
    %30 = vector.load %arg6[%c0_40, %c0_41] : memref<128x128xf32, #tpu.memory_space<vmem>>, vector<128x128xf32>
    %c0_42 = arith.constant 0 : index
    %c0_43 = arith.constant 0 : index
    %c17 = arith.constant 17 : index
    %c0_44 = arith.constant 0 : index
    %31 = vector.load %arg2[%c0_42, %c0_43, %c17, %c0_44] : memref<1x1x176x16xbf16, #tpu.memory_space<vmem>>, vector<1x1x128x16xbf16>
    %32 = vector.shape_cast %31 : vector<1x1x128x16xbf16> to vector<128x16xbf16>
    %c4 = arith.constant 4 : index
    %c0_45 = arith.constant 0 : index
    %c0_46 = arith.constant 0 : index
    %33 = vector.load %arg3[%c4, %c0_45, %c0_46] : memref<9x16x128xbf16, #tpu.memory_space<vmem>>, vector<1x16x128xbf16>
    %34 = vector.shape_cast %33 : vector<1x16x128xbf16> to vector<16x128xbf16>
    %cst_47 = arith.constant dense<0.000000e+00> : vector<128x128xf32>
    %35 = tpu.matmul %32, %34, %cst_47 {dimension_numbers = #tpu.dot_dimension_numbers<[1], [0], [0], [1], [0, 0, 1, 1], [], []>} : vector<128x16xbf16>, vector<16x128xbf16>, vector<128x128xf32> -> vector<128x128xf32>
    %36 = arith.addf %30, %35 : vector<128x128xf32>
    %c0_48 = arith.constant 0 : index
    %c0_49 = arith.constant 0 : index
    %37 = vector.load %arg6[%c0_48, %c0_49] : memref<128x128xf32, #tpu.memory_space<vmem>>, vector<128x128xf32>
    tpu.vector_store %arg6[%c0_48, %c0_49], %36 {strides = array<i32>} : memref<128x128xf32, #tpu.memory_space<vmem>>, vector<128x128xf32>,
    %c0_50 = arith.constant 0 : index
    %c0_51 = arith.constant 0 : index
    %38 = vector.load %arg6[%c0_50, %c0_51] : memref<128x128xf32, #tpu.memory_space<vmem>>, vector<128x128xf32>
    %c0_52 = arith.constant 0 : index
    %c0_53 = arith.constant 0 : index
    %c18 = arith.constant 18 : index
    %c0_54 = arith.constant 0 : index
    %39 = vector.load %arg2[%c0_52, %c0_53, %c18, %c0_54] : memref<1x1x176x16xbf16, #tpu.memory_space<vmem>>, vector<1x1x128x16xbf16>
    %40 = vector.shape_cast %39 : vector<1x1x128x16xbf16> to vector<128x16xbf16>
    %c5 = arith.constant 5 : index
    %c0_55 = arith.constant 0 : index
    %c0_56 = arith.constant 0 : index
    %41 = vector.load %arg3[%c5, %c0_55, %c0_56] : memref<9x16x128xbf16, #tpu.memory_space<vmem>>, vector<1x16x128xbf16>
    %42 = vector.shape_cast %41 : vector<1x16x128xbf16> to vector<16x128xbf16>
    %cst_57 = arith.constant dense<0.000000e+00> : vector<128x128xf32>
    %43 = tpu.matmul %40, %42, %cst_57 {dimension_numbers = #tpu.dot_dimension_numbers<[1], [0], [0], [1], [0, 0, 1, 1], [], []>} : vector<128x16xbf16>, vector<16x128xbf16>, vector<128x128xf32> -> vector<128x128xf32>
    %44 = arith.addf %38, %43 : vector<128x128xf32>
    %c0_58 = arith.constant 0 : index
    %c0_59 = arith.constant 0 : index
    %45 = vector.load %arg6[%c0_58, %c0_59] : memref<128x128xf32, #tpu.memory_space<vmem>>, vector<128x128xf32>
    tpu.vector_store %arg6[%c0_58, %c0_59], %44 {strides = array<i32>} : memref<128x128xf32, #tpu.memory_space<vmem>>, vector<128x128xf32>,
    %c0_60 = arith.constant 0 : index
    %c0_61 = arith.constant 0 : index
    %46 = vector.load %arg6[%c0_60, %c0_61] : memref<128x128xf32, #tpu.memory_space<vmem>>, vector<128x128xf32>
    %c0_62 = arith.constant 0 : index
    %c0_63 = arith.constant 0 : index
    %c32 = arith.constant 32 : index
    %c0_64 = arith.constant 0 : index
    %47 = vector.load %arg2[%c0_62, %c0_63, %c32, %c0_64] : memref<1x1x176x16xbf16, #tpu.memory_space<vmem>>, vector<1x1x128x16xbf16>
    %48 = vector.shape_cast %47 : vector<1x1x128x16xbf16> to vector<128x16xbf16>
    %c6 = arith.constant 6 : index
    %c0_65 = arith.constant 0 : index
    %c0_66 = arith.constant 0 : index
    %49 = vector.load %arg3[%c6, %c0_65, %c0_66] : memref<9x16x128xbf16, #tpu.memory_space<vmem>>, vector<1x16x128xbf16>
    %50 = vector.shape_cast %49 : vector<1x16x128xbf16> to vector<16x128xbf16>
    %cst_67 = arith.constant dense<0.000000e+00> : vector<128x128xf32>
    %51 = tpu.matmul %48, %50, %cst_67 {dimension_numbers = #tpu.dot_dimension_numbers<[1], [0], [0], [1], [0, 0, 1, 1], [], []>} : vector<128x16xbf16>, vector<16x128xbf16>, vector<128x128xf32> -> vector<128x128xf32>
    %52 = arith.addf %46, %51 : vector<128x128xf32>
    %c0_68 = arith.constant 0 : index
    %c0_69 = arith.constant 0 : index
    %53 = vector.load %arg6[%c0_68, %c0_69] : memref<128x128xf32, #tpu.memory_space<vmem>>, vector<128x128xf32>
    tpu.vector_store %arg6[%c0_68, %c0_69], %52 {strides = array<i32>} : memref<128x128xf32, #tpu.memory_space<vmem>>, vector<128x128xf32>,
    %c0_70 = arith.constant 0 : index
    %c0_71 = arith.constant 0 : index
    %54 = vector.load %arg6[%c0_70, %c0_71] : memref<128x128xf32, #tpu.memory_space<vmem>>, vector<128x128xf32>
    %c0_72 = arith.constant 0 : index
    %c0_73 = arith.constant 0 : index
    %c33 = arith.constant 33 : index
    %c0_74 = arith.constant 0 : index
    %55 = vector.load %arg2[%c0_72, %c0_73, %c33, %c0_74] : memref<1x1x176x16xbf16, #tpu.memory_space<vmem>>, vector<1x1x128x16xbf16>
    %56 = vector.shape_cast %55 : vector<1x1x128x16xbf16> to vector<128x16xbf16>
    %c7 = arith.constant 7 : index
    %c0_75 = arith.constant 0 : index
    %c0_76 = arith.constant 0 : index
    %57 = vector.load %arg3[%c7, %c0_75, %c0_76] : memref<9x16x128xbf16, #tpu.memory_space<vmem>>, vector<1x16x128xbf16>
    %58 = vector.shape_cast %57 : vector<1x16x128xbf16> to vector<16x128xbf16>
    %cst_77 = arith.constant dense<0.000000e+00> : vector<128x128xf32>
    %59 = tpu.matmul %56, %58, %cst_77 {dimension_numbers = #tpu.dot_dimension_numbers<[1], [0], [0], [1], [0, 0, 1, 1], [], []>} : vector<128x16xbf16>, vector<16x128xbf16>, vector<128x128xf32> -> vector<128x128xf32>
    %60 = arith.addf %54, %59 : vector<128x128xf32>
    %c0_78 = arith.constant 0 : index
    %c0_79 = arith.constant 0 : index
    %61 = vector.load %arg6[%c0_78, %c0_79] : memref<128x128xf32, #tpu.memory_space<vmem>>, vector<128x128xf32>
    tpu.vector_store %arg6[%c0_78, %c0_79], %60 {strides = array<i32>} : memref<128x128xf32, #tpu.memory_space<vmem>>, vector<128x128xf32>,
    %c0_80 = arith.constant 0 : index
    %c0_81 = arith.constant 0 : index
    %62 = vector.load %arg6[%c0_80, %c0_81] : memref<128x128xf32, #tpu.memory_space<vmem>>, vector<128x128xf32>
    %c0_82 = arith.constant 0 : index
    %c0_83 = arith.constant 0 : index
    %c34 = arith.constant 34 : index
    %c0_84 = arith.constant 0 : index
    %63 = vector.load %arg2[%c0_82, %c0_83, %c34, %c0_84] : memref<1x1x176x16xbf16, #tpu.memory_space<vmem>>, vector<1x1x128x16xbf16>
    %64 = vector.shape_cast %63 : vector<1x1x128x16xbf16> to vector<128x16xbf16>
    %c8 = arith.constant 8 : index
    %c0_85 = arith.constant 0 : index
    %c0_86 = arith.constant 0 : index
    %65 = vector.load %arg3[%c8, %c0_85, %c0_86] : memref<9x16x128xbf16, #tpu.memory_space<vmem>>, vector<1x16x128xbf16>
    %66 = vector.shape_cast %65 : vector<1x16x128xbf16> to vector<16x128xbf16>
    %cst_87 = arith.constant dense<0.000000e+00> : vector<128x128xf32>
    %67 = tpu.matmul %64, %66, %cst_87 {dimension_numbers = #tpu.dot_dimension_numbers<[1], [0], [0], [1], [0, 0, 1, 1], [], []>} : vector<128x16xbf16>, vector<16x128xbf16>, vector<128x128xf32> -> vector<128x128xf32>
    %68 = arith.addf %62, %67 : vector<128x128xf32>
    %c0_88 = arith.constant 0 : index
    %c0_89 = arith.constant 0 : index
    %69 = vector.load %arg6[%c0_88, %c0_89] : memref<128x128xf32, #tpu.memory_space<vmem>>, vector<128x128xf32>
    tpu.vector_store %arg6[%c0_88, %c0_89], %68 {strides = array<i32>} : memref<128x128xf32, #tpu.memory_space<vmem>>, vector<128x128xf32>,
    %c0_90 = arith.constant 0 : index
    %c0_91 = arith.constant 0 : index
    %70 = vector.load %arg6[%c0_90, %c0_91] : memref<128x128xf32, #tpu.memory_space<vmem>>, vector<128x128xf32>
    %c0_92 = arith.constant 0 : index
    %c0_93 = arith.constant 0 : index
    %71 = vector.load %arg4[%c0_92, %c0_93] : memref<1x128xf32, #tpu.memory_space<vmem>>, vector<1x128xf32>
    %72 = vector.broadcast %71 : vector<1x128xf32> to vector<128x128xf32>
    %73 = arith.addf %70, %72 : vector<128x128xf32>
    %74 = arith.negf %73 : vector<128x128xf32>
    %75 = math.exp %74 : vector<128x128xf32>
    %cst_94 = arith.constant 1.000000e+00 : f32
    %76 = vector.broadcast %cst_94 : f32 to vector<128x128xf32>
    %77 = arith.addf %76, %75 : vector<128x128xf32>
    %78 = arith.divf %76, %77 : vector<128x128xf32>
    %79 = arith.mulf %73, %78 : vector<128x128xf32>
    %80 = arith.truncf %79 : vector<128x128xf32> to vector<128x128xbf16>
    %c0_95 = arith.constant 0 : index
    %c0_96 = arith.constant 0 : index
    %c0_97 = arith.constant 0 : index
    %c0_98 = arith.constant 0 : index
    %81 = vector.load %arg5[%c0_95, %c0_96, %c0_97, %c0_98] : memref<1x1x128x128xbf16, #tpu.memory_space<vmem>>, vector<1x1x128x128xbf16>
    %82 = vector.shape_cast %81 : vector<1x1x128x128xbf16> to vector<128x128xbf16>
    %83 = vector.shape_cast %80 : vector<128x128xbf16> to vector<1x1x128x128xbf16>
    tpu.vector_store %arg5[%c0_95, %c0_96, %c0_97, %c0_98], %83 {strides = array<i32>} : memref<1x1x128x128xbf16, #tpu.memory_space<vmem>>, vector<1x1x128x128xbf16>,
    return
  }
  func.func @transform_0(%arg0: i32, %arg1: i32) -> (i32, i32, i32, i32) {
    %c0_i32 = arith.constant 0 : i32
    %c0_i32_0 = arith.constant 0 : i32
    %c0_i32_1 = arith.constant 0 : i32
    return %arg0, %arg1, %c0_i32, %c0_i32_0 : i32, i32, i32, i32
  }
  func.func @transform_1(%arg0: i32, %arg1: i32) -> (i32, i32, i32) {
    %c0_i32 = arith.constant 0 : i32
    %c0_i32_0 = arith.constant 0 : i32
    %c0_i32_1 = arith.constant 0 : i32
    %c0_i32_2 = arith.constant 0 : i32
    return %c0_i32, %c0_i32_0, %c0_i32_1 : i32, i32, i32
  }
  func.func @transform_2(%arg0: i32, %arg1: i32) -> (i32, i32) {
    %c0_i32 = arith.constant 0 : i32
    %c0_i32_0 = arith.constant 0 : i32
    %c0_i32_1 = arith.constant 0 : i32
    return %c0_i32, %c0_i32_0 : i32, i32
  }
  func.func @transform_3(%arg0: i32, %arg1: i32) -> (i32, i32, i32, i32) {
    %c0_i32 = arith.constant 0 : i32
    %c0_i32_0 = arith.constant 0 : i32
    %c0_i32_1 = arith.constant 0 : i32
    return %arg0, %arg1, %c0_i32, %c0_i32_0 : i32, i32, i32, i32
  }
}

</mosaic_0001>

<llo_original>
// kernel: spdconv1_forward.1
$region0: #{spdconv1_forward.1}
  #allocation0 [shape = 'u32[]', space=smem, size = 0x4, offset = 0x4, fixed_abs, tag = 'smem constant byte address 0x4 - core index']
  #allocation1 [shape = 'u32[144,128]{1,0:T(1,128)}', space=vmem, size = 0x12000, scoped, tag = 'internal scratch']
  #allocation2 [shape = 'f32[128,128]{1,0:T(8,128)}', space=vmem, size = 0x10000, scoped, tag = 'scratch operand']
  %s0 = inlined_call_operand.vmem [shape: bf16[2,1,176,16], index: 0, kind: input, shape index: {}]
  %s1 = inlined_call_operand.vmem [shape: bf16[9,16,128], index: 1, kind: input, shape index: {}]
  %s2 = inlined_call_operand.vmem [shape: f32[1,128], index: 2, kind: input, shape index: {}]
  %s3 = inlined_call_operand.vmem [shape: bf16[2,1,128,128], index: 3, kind: output, shape index: {}]
  %s4 = sld [smem:[#allocation0]]
  $region45: #{spdconv1_forward.1} parent=0
    _
  %s6 = ssub.s32 1, %s4
  %s7 = scalar_select 0, %s6, %s4
  loop: start=0, step=1, limit=4
  $region2: #{spdconv1_forward.1} parent=0 // loop_pre_header
    _
  $region3: #{spdconv1_forward.1} parent=0 // loop_header
    %s9 = sphi 0, %s13
    %p10 = scmp.ge.s32.totalorder %s9, 4
    %s16 = sphi 0, %s28
    %s17 = sphi 0, %s24
    %s18 = sphi 0, %s16
    %s19 = sphi 0, %s17
    %s20 = sphi 0, %s18
    %s21 = sphi 0, %s19
    %s33 = sphi 0, %s35
    %s36 = sphi 0, %s33
    %s37 = sphi 0, %s36
    %s53 = sphi 0, %s37
    %s57 = sphi 0, %s57
    %s59 = sphi 0, %s57
    %s60 = sphi 0, %s59
    %s74 = sphi 0, %s60
    %s78 = sphi 0, %s78
    %s80 = sphi 0, %s78
    %s81 = sphi 0, %s80
    %s95 = sphi 0, %s81
    %s103 = sphi 0, %s105
    %s106 = sphi 0, %s103
    %s107 = sphi 0, %s106
    %s123 = sphi 0, %s107
  $region4: #{spdconv1_forward.1} parent=0 // loop_header_branch
    %12 = sbr.rel (%p10) target = $region8
  $region5: #{spdconv1_forward.1} parent=0 // loop_body
    %s14 = ssub.s32 %s9, 1
    %s15 = ssub.s32 %s9, 2
    %s22 = sadd.s32 1, %s17
    %p23 = scmp.ge.s32.totalorder %s22, 1
    %s24 = scalar_select %p23, 0, %s22
    %s25 = sadd.s32 1, %s16
    %s26 = scalar_select %p23, %s25, %s16
    %p27 = scmp.ge.s32.totalorder %s26, 2
    %s28 = scalar_select %p27, 0, %s26
    %s29 = ssub.s32 %s16, %s28
    %s30 = ssub.s32 %s17, %s24
    %s31 = sor.u32 %s29, %s30
    %p32 = scmp.eq.s32.totalorder %s31, 0
    %s34 = sadd.s32 %s33, 1
    %s35 = scalar_select %p32, %s33, %s34
    %p38 = pneg %p32
    %p39 = scmp.eq.s32.totalorder %s9, 1
    %p40 = por %p38, %p39
    %p41 = scmp.ne.s32.totalorder %s33, %s36
    %p42 = scmp.eq.s32.totalorder %s9, 0
    %p43 = por %p41, %p42
    %p44 = scmp.ne.s32.totalorder %s33, %s36
    %p45 = scmp.eq.s32.totalorder %s14, 1
    %p46 = por %p44, %p45
    %p47 = scmp.ne.s32.totalorder %s36, %s37
    %p48 = scmp.eq.s32.totalorder %s14, 0
    %p49 = por %p47, %p48
    %p50 = scmp.ne.s32.totalorder %s36, %s37
    %p51 = scmp.eq.s32.totalorder %s15, 1
    %p52 = por %p50, %p51
    %p54 = scmp.ne.s32.totalorder %s37, %s53
    %p55 = scmp.eq.s32.totalorder %s15, 0
    %p56 = por %p54, %p55
    %s58 = sadd.s32 %s57, 1
    %p61 = scmp.eq.s32.totalorder %s9, 1
    %p62 = scmp.ne.s32.totalorder %s57, %s59
    %p63 = scmp.eq.s32.totalorder %s9, 0
    %p64 = por %p62, %p63
    %p65 = scmp.ne.s32.totalorder %s57, %s59
    %p66 = scmp.eq.s32.totalorder %s14, 1
    %p67 = por %p65, %p66
    %p68 = scmp.ne.s32.totalorder %s59, %s60
    %p69 = scmp.eq.s32.totalorder %s14, 0
    %p70 = por %p68, %p69
    %p71 = scmp.ne.s32.totalorder %s59, %s60
    %p72 = scmp.eq.s32.totalorder %s15, 1
    %p73 = por %p71, %p72
    %p75 = scmp.ne.s32.totalorder %s60, %s74
    %p76 = scmp.eq.s32.totalorder %s15, 0
    %p77 = por %p75, %p76
    %s79 = sadd.s32 %s78, 1
    %p82 = scmp.eq.s32.totalorder %s9, 1
    %p83 = scmp.ne.s32.totalorder %s78, %s80
    %p84 = scmp.eq.s32.totalorder %s9, 0
    %p85 = por %p83, %p84
    %p86 = scmp.ne.s32.totalorder %s78, %s80
    %p87 = scmp.eq.s32.totalorder %s14, 1
    %p88 = por %p86, %p87
    %p89 = scmp.ne.s32.totalorder %s80, %s81
    %p90 = scmp.eq.s32.totalorder %s14, 0
    %p91 = por %p89, %p90
    %p92 = scmp.ne.s32.totalorder %s80, %s81
    %p93 = scmp.eq.s32.totalorder %s15, 1
    %p94 = por %p92, %p93
    %p96 = scmp.ne.s32.totalorder %s81, %s95
    %p97 = scmp.eq.s32.totalorder %s15, 0
    %p98 = por %p96, %p97
    %s99 = ssub.s32 %s16, %s28
    %s100 = ssub.s32 %s17, %s24
    %s101 = sor.u32 %s99, %s100
    %p102 = scmp.eq.s32.totalorder %s101, 0
    %s104 = sadd.s32 %s103, 1
    %s105 = scalar_select %p102, %s103, %s104
    %p108 = pneg %p102
    %p109 = scmp.eq.s32.totalorder %s9, 1
    %p110 = por %p108, %p109
    %p111 = scmp.ne.s32.totalorder %s103, %s106
    %p112 = scmp.eq.s32.totalorder %s9, 0
    %p113 = por %p111, %p112
    %p114 = scmp.ne.s32.totalorder %s103, %s106
    %p115 = scmp.eq.s32.totalorder %s14, 1
    %p116 = por %p114, %p115
    %p117 = scmp.ne.s32.totalorder %s106, %s107
    %p118 = scmp.eq.s32.totalorder %s14, 0
    %p119 = por %p117, %p118
    %p120 = scmp.ne.s32.totalorder %s106, %s107
    %p121 = scmp.eq.s32.totalorder %s15, 1
    %p122 = por %p120, %p121
    %p124 = scmp.ne.s32.totalorder %s107, %s123
    %p125 = scmp.eq.s32.totalorder %s15, 0
    %p126 = por %p124, %p125
    %p127 = scmp.le.s32.totalorder 1, %s9
    %p128 = scmp.lt.s32.totalorder %s9, 3
    %p129 = pnand %p127, %p128
    %p130 = pneg %p129
    // Predicated region
    $region9: #{spdconv1_forward.1} parent=5 // pred_check
      _
    $region10: #{spdconv1_forward.1} parent=5 // pred_check_branch
      %132 = sbr.rel (%p129) target = $region12
    $region11: #{spdconv1_forward.1} parent=5 // pred_region
      %s133 = ssub.s32 %s9, 1
      // Predicated region
      $region13: #{spdconv1_forward.1} parent=11 // pred_check
        %p134 = pneg %p70
      $region14: #{spdconv1_forward.1} parent=11 // pred_check_branch
        %136 = sbr.rel (%p134) target = $region16
      $region15: #{spdconv1_forward.1} parent=11 // pred_region
        _
      $region16: #{spdconv1_forward.1} parent=11 // pred_fallthru
        _
      // Predicated region
      $region17: #{spdconv1_forward.1} parent=11 // pred_check
        %p137 = pneg %p91
      $region18: #{spdconv1_forward.1} parent=11 // pred_check_branch
        %139 = sbr.rel (%p137) target = $region20
      $region19: #{spdconv1_forward.1} parent=11 // pred_region
        _
      $region20: #{spdconv1_forward.1} parent=11 // pred_fallthru
        _
    $region12: #{spdconv1_forward.1} parent=5 // pred_fallthru
      _
    %p140 = scmp.lt.s32.totalorder %s9, 2
    // Predicated region
    $region21: #{spdconv1_forward.1} parent=5 // pred_check
      %p141 = pneg %p140
    $region22: #{spdconv1_forward.1} parent=5 // pred_check_branch
      %143 = sbr.rel (%p141) target = $region24
    $region23: #{spdconv1_forward.1} parent=5 // pred_region
      // Predicated region
      $region25: #{spdconv1_forward.1} parent=23 // pred_check
        %p144 = pneg %p43
      $region26: #{spdconv1_forward.1} parent=23 // pred_check_branch
        %146 = sbr.rel (%p144) target = $region28
      $region27: #{spdconv1_forward.1} parent=23 // pred_region
        %p147 = scmp.lt.s32.totalorder %s16, 1
        %s148 = scalar_select %p147, %s16, 1
        %p149 = scmp.lt.s32.totalorder %s17, 0
        %s150 = scalar_select %p149, %s17, 0
        %s151 = smul.addr %s150, 22
        %s152 = smul.addr %s148, 22
        %s153 = sadd.s32 %s151, %s152
        %s154 = smul.addr %s153, 4
        %s155 = scalar_lea.vmem %s0, %s154
      $region28: #{spdconv1_forward.1} parent=23 // pred_fallthru
        _
    $region24: #{spdconv1_forward.1} parent=5 // pred_fallthru
      _
    %p156 = scmp.le.s32.totalorder 1, %s9
    %p157 = scmp.lt.s32.totalorder %s9, 3
    %p158 = pnand %p156, %p157
    %p159 = pneg %p158
    // Predicated region
    $region29: #{spdconv1_forward.1} parent=5 // pred_check
      _
    $region30: #{spdconv1_forward.1} parent=5 // pred_check_branch
      %161 = sbr.rel (%p158) target = $region32
    $region31: #{spdconv1_forward.1} parent=5 // pred_region
      %s162 = ssub.s32 %s9, 1
      %p163 = scmp.lt.s32.totalorder %s18, 1
      %s164 = scalar_select %p163, %s18, 1
      %p165 = scmp.lt.s32.totalorder %s19, 0
      %s166 = scalar_select %p165, %s19, 0
      %s167 = smul.addr %s166, 22
      %s168 = smul.addr %s164, 22
      %s169 = sadd.s32 %s167, %s168
      %s170 = smul.addr %s169, 4
      %s171 = scalar_lea.vmem %s0, %s170
      %p172 = pneg %p49
      %p173 = pneg %p46
      %p174 = pneg %p70
      %p175 = pneg %p67
      %p176 = pneg %p91
      %p177 = pneg %p88
      %p178 = pneg %p119
      %p179 = pneg %p116
      %p180 = scmp.lt.s32.totalorder %s18, 1
      %s181 = scalar_select %p180, %s18, 1
      %p182 = scmp.lt.s32.totalorder %s19, 0
      %s183 = scalar_select %p182, %s19, 0
      %s184 = smul.addr %s183, 16
      %s185 = smul.addr %s181, 16
      %s186 = sadd.s32 %s184, %s185
      %s187 = smul.addr %s186, 4
      %s188 = scalar_lea.vmem %s3, %s187
      %p189 = scmp.lt.s32.totalorder %s18, 1
      %s190 = scalar_select %p189, %s18, 1
      %p191 = scmp.lt.s32.totalorder %s19, 0
      %s192 = scalar_select %p191, %s19, 0
      %s193 = smul.addr %s192, 22
      %s194 = smul.addr %s190, 22
      %s195 = sadd.s32 %s193, %s194
      %s196 = smul.addr %s195, 4
      %s197 = scalar_lea.vmem %s0, %s196
      %p198 = scmp.lt.s32.totalorder %s18, 1
      %s199 = scalar_select %p198, %s18, 1
      %p200 = scmp.lt.s32.totalorder %s19, 0
      %s201 = scalar_select %p200, %s19, 0
      %s202 = smul.addr %s201, 16
      %s203 = smul.addr %s199, 16
      %s204 = sadd.s32 %s202, %s203
      %s205 = smul.addr %s204, 4
      %s206 = scalar_lea.vmem %s3, %s205
      %v208 = vld [vmem:[%s197] sm:$0xf]
      %v209 = vld [vmem:[%s197 + $0x4] sm:$0xf]
      %v210 = vld [vmem:[%s197 + $0x8] sm:$0xf]
      %v211 = vld [vmem:[%s197 + $0xc] sm:$0xf]
      %v212 = vld [vmem:[%s197 + $0x10] sm:$0xf]
      %v213 = vld [vmem:[%s197 + $0x14] sm:$0xf]
      %v214 = vld [vmem:[%s197 + $0x18] sm:$0xf]
      %v215 = vld [vmem:[%s197 + $0x1c] sm:$0xf]
      %v216 = vld [vmem:[%s197 + $0x20] sm:$0xf]
      %v217 = vld [vmem:[%s197 + $0x24] sm:$0xf]
      %v218 = vld [vmem:[%s197 + $0x28] sm:$0xf]
      %v219 = vld [vmem:[%s197 + $0x2c] sm:$0xf]
      %v220 = vld [vmem:[%s197 + $0x30] sm:$0xf]
      %v221 = vld [vmem:[%s197 + $0x34] sm:$0xf]
      %v222 = vld [vmem:[%s197 + $0x38] sm:$0xf]
      %v223 = vld [vmem:[%s197 + $0x3c] sm:$0xf]
      %v224 = vld [vmem:[%s1] sm:$0xf]
      %v225 = vld [vmem:[%s1 + $0x4] sm:$0xf]
      %v242 = vunpack.c.l.b16 %v208
      %v243 = vunpack.c.l.b16 %v209
      %v244 = vunpack.c.l.b16 %v210
      %v245 = vunpack.c.l.b16 %v211
      %v246 = vunpack.c.l.b16 %v212
      %v247 = vunpack.c.l.b16 %v213
      %v248 = vunpack.c.l.b16 %v214
      %v249 = vunpack.c.l.b16 %v215
      %v250 = vunpack.c.l.b16 %v216
      %v251 = vunpack.c.l.b16 %v217
      %v252 = vunpack.c.l.b16 %v218
      %v253 = vunpack.c.l.b16 %v219
      %v254 = vunpack.c.l.b16 %v220
      %v255 = vunpack.c.l.b16 %v221
      %v256 = vunpack.c.l.b16 %v222
      %v257 = vunpack.c.l.b16 %v223
      %v258 = vpack.c.b16 %v243, %v242
      %v259 = vpack.c.b16 %v245, %v244
      %v260 = vpack.c.b16 %v247, %v246
      %v261 = vpack.c.b16 %v249, %v248
      %v262 = vpack.c.b16 %v251, %v250
      %v263 = vpack.c.b16 %v253, %v252
      %v264 = vpack.c.b16 %v255, %v254
      %v265 = vpack.c.b16 %v257, %v256
      %v268 = vunpack.c.l.b16 %v224
      %v269 = vunpack.c.l.b16 %v225
      %v270 = vpack.c.b16 %v269, %v268
      %vm272 = vcmask 130048
      %v274 = vsel %vm272, %v258, 0
      %v277 = vsel %vm272, %v259, 0
      %v280 = vsel %vm272, %v260, 0
      %v283 = vsel %vm272, %v261, 0
      %v286 = vsel %vm272, %v262, 0
      %v289 = vsel %vm272, %v263, 0
      %v292 = vsel %vm272, %v264, 0
      %v295 = vsel %vm272, %v265, 0
      %297 = vmatprep.subr.bf16.mxu0 0
      %298 = vmatpush1.bf16.msra.mxu0 0
      %299 = vmatprep.subr.bf16.mxu0 0
      %300 = vmatpush1.bf16.msra.mxu0 0
      %301 = vmatprep.subr.bf16.mxu0 0
      %302 = vmatpush1.bf16.msra.mxu0 0
      %303 = vmatprep.subr.bf16.mxu0 0
      %304 = vmatpush1.bf16.msra.mxu0 0
      %305 = vmatprep.subr.bf16.mxu0 0
      %306 = vmatpush1.bf16.msra.mxu0 0
      %307 = vmatprep.subr.bf16.mxu0 0
      %308 = vmatpush1.bf16.msra.mxu0 0
      %309 = vmatprep.subr.bf16.mxu0 0
      %310 = vmatpush1.bf16.msra.mxu0 0
      %311 = vmatprep.subr.bf16.mxu0 0
      %312 = vmatpush1.bf16.msra.mxu0 %v270
      %313 = vmatprep.subr.bf16.mxu0 0
      %314 = vmatpush2.bf16.msra.mxu0 0
      %315 = vmatprep.subr.bf16.mxu0 0
      %316 = vmatpush2.bf16.msra.mxu0 0
      %317 = vmatprep.subr.bf16.mxu0 0
      %318 = vmatpush2.bf16.msra.mxu0 0
      %319 = vmatprep.subr.bf16.mxu0 0
      %320 = vmatpush2.bf16.msra.mxu0 0
      %321 = vmatprep.subr.bf16.mxu0 0
      %322 = vmatpush2.bf16.msra.mxu0 0
      %323 = vmatprep.subr.bf16.mxu0 0
      %324 = vmatpush2.bf16.msra.mxu0 0
      %325 = vmatprep.subr.bf16.mxu0 0
      %326 = vmatpush2.bf16.msra.mxu0 0
      %327 = vmatprep.subr.bf16.mxu0 0
      %328 = vmatpush2.bf16.msra.mxu0 0
      %329 = vmatprep.mubr.bf16.mxu0 0
      %330 = vmatmul.mubr.bf16.gmra.mxu0 %v274
      %v331 = vpop.f32.mrf.mxu0
      %v332 = vadd.f32 0.0, %v331
      %v333 = vpop.f32.mrf.mxu0
      %v334 = vpop.f32.mrf.mxu0
      %v335 = vadd.f32 0.0, %v334
      %v336 = vpop.f32.mrf.mxu0
      %337 = vmatprep.mubr.bf16.mxu0 0
      %338 = vmatmul.mubr.bf16.gmra.mxu0 %v277
      %v339 = vpop.f32.mrf.mxu0
      %v340 = vadd.f32 0.0, %v339
      %v341 = vpop.f32.mrf.mxu0
      %v342 = vpop.f32.mrf.mxu0
      %v343 = vadd.f32 0.0, %v342
      %v344 = vpop.f32.mrf.mxu0
      %345 = vmatprep.mubr.bf16.mxu0 0
      %346 = vmatmul.mubr.bf16.gmra.mxu0 %v280
      %v347 = vpop.f32.mrf.mxu0
      %v348 = vadd.f32 0.0, %v347
      %v349 = vpop.f32.mrf.mxu0
      %v350 = vpop.f32.mrf.mxu0
      %v351 = vadd.f32 0.0, %v350
      %v352 = vpop.f32.mrf.mxu0
      %353 = vmatprep.mubr.bf16.mxu0 0
      %354 = vmatmul.mubr.bf16.gmra.mxu0 %v283
      %v355 = vpop.f32.mrf.mxu0
      %v356 = vadd.f32 0.0, %v355
      %v357 = vpop.f32.mrf.mxu0
      %v358 = vpop.f32.mrf.mxu0
      %v359 = vadd.f32 0.0, %v358
      %v360 = vpop.f32.mrf.mxu0
      %361 = vmatprep.mubr.bf16.mxu0 0
      %362 = vmatmul.mubr.bf16.gmra.mxu0 %v286
      %v363 = vpop.f32.mrf.mxu0
      %v364 = vadd.f32 0.0, %v363
      %v365 = vpop.f32.mrf.mxu0
      %v366 = vpop.f32.mrf.mxu0
      %v367 = vadd.f32 0.0, %v366
      %v368 = vpop.f32.mrf.mxu0
      %369 = vmatprep.mubr.bf16.mxu0 0
      %370 = vmatmul.mubr.bf16.gmra.mxu0 %v289
      %v371 = vpop.f32.mrf.mxu0
      %v372 = vadd.f32 0.0, %v371
      %v373 = vpop.f32.mrf.mxu0
      %v374 = vpop.f32.mrf.mxu0
      %v375 = vadd.f32 0.0, %v374
      %v376 = vpop.f32.mrf.mxu0
      %377 = vmatprep.mubr.bf16.mxu0 0
      %378 = vmatmul.mubr.bf16.gmra.mxu0 %v292
      %v379 = vpop.f32.mrf.mxu0
      %v380 = vadd.f32 0.0, %v379
      %v381 = vpop.f32.mrf.mxu0
      %v382 = vpop.f32.mrf.mxu0
      %v383 = vadd.f32 0.0, %v382
      %v384 = vpop.f32.mrf.mxu0
      %385 = vmatprep.mubr.bf16.mxu0 0
      %386 = vmatmul.mubr.bf16.gmra.mxu0 %v295
      %v387 = vpop.f32.mrf.mxu0
      %v388 = vadd.f32 0.0, %v387
      %v389 = vpop.f32.mrf.mxu0
      %v390 = vpop.f32.mrf.mxu0
      %v391 = vadd.f32 0.0, %v390
      %v392 = vpop.f32.mrf.mxu0
      %393 = vdwg.mxu0
      %394 = vst [vmem:[#allocation2] sm:$0xff] %v332
      %395 = vst [vmem:[#allocation2 + $0x8] sm:$0xff] %v335
      %396 = vst [vmem:[#allocation2 + $0x10] sm:$0xff] %v340
      %397 = vst [vmem:[#allocation2 + $0x18] sm:$0xff] %v343
      %398 = vst [vmem:[#allocation2 + $0x20] sm:$0xff] %v348
      %399 = vst [vmem:[#allocation2 + $0x28] sm:$0xff] %v351
      %400 = vst [vmem:[#allocation2 + $0x30] sm:$0xff] %v356
      %401 = vst [vmem:[#allocation2 + $0x38] sm:$0xff] %v359
      %402 = vst [vmem:[#allocation2 + $0x40] sm:$0xff] %v364
      %403 = vst [vmem:[#allocation2 + $0x48] sm:$0xff] %v367
      %404 = vst [vmem:[#allocation2 + $0x50] sm:$0xff] %v372
      %405 = vst [vmem:[#allocation2 + $0x58] sm:$0xff] %v375
      %406 = vst [vmem:[#allocation2 + $0x60] sm:$0xff] %v380
      %407 = vst [vmem:[#allocation2 + $0x68] sm:$0xff] %v383
      %408 = vst [vmem:[#allocation2 + $0x70] sm:$0xff] %v388
      %409 = vst [vmem:[#allocation2 + $0x78] sm:$0xff] %v391
      %v410 = vld [vmem:[#allocation2] sm:$0xff]
      %v411 = vld [vmem:[#allocation2 + $0x8] sm:$0xff]
      %v412 = vld [vmem:[#allocation2 + $0x10] sm:$0xff]
      %v413 = vld [vmem:[#allocation2 + $0x18] sm:$0xff]
      %v414 = vld [vmem:[#allocation2 + $0x20] sm:$0xff]
      %v415 = vld [vmem:[#allocation2 + $0x28] sm:$0xff]
      %v416 = vld [vmem:[#allocation2 + $0x30] sm:$0xff]
      %v417 = vld [vmem:[#allocation2 + $0x38] sm:$0xff]
      %v418 = vld [vmem:[#allocation2 + $0x40] sm:$0xff]
      %v419 = vld [vmem:[#allocation2 + $0x48] sm:$0xff]
      %v420 = vld [vmem:[#allocation2 + $0x50] sm:$0xff]
      %v421 = vld [vmem:[#allocation2 + $0x58] sm:$0xff]
      %v422 = vld [vmem:[#allocation2 + $0x60] sm:$0xff]
      %v423 = vld [vmem:[#allocation2 + $0x68] sm:$0xff]
      %v424 = vld [vmem:[#allocation2 + $0x70] sm:$0xff]
      %v425 = vld [vmem:[#allocation2 + $0x78] sm:$0xff]
      %v426 = vld [vmem:[%s197] sm:$0xf]
      %v427 = vld [vmem:[%s197 + $0x4] sm:$0xf]
      %v428 = vld [vmem:[%s197 + $0x8] sm:$0xf]
      %v429 = vld [vmem:[%s197 + $0xc] sm:$0xf]
      %v430 = vld [vmem:[%s197 + $0x10] sm:$0xf]
      %v431 = vld [vmem:[%s197 + $0x14] sm:$0xf]
      %v432 = vld [vmem:[%s197 + $0x18] sm:$0xf]
      %v433 = vld [vmem:[%s197 + $0x1c] sm:$0xf]
      %v434 = vld [vmem:[%s197 + $0x20] sm:$0xf]
      %v435 = vld [vmem:[%s197 + $0x24] sm:$0xf]
      %v436 = vld [vmem:[%s197 + $0x28] sm:$0xf]
      %v437 = vld [vmem:[%s197 + $0x2c] sm:$0xf]
      %v438 = vld [vmem:[%s197 + $0x30] sm:$0xf]
      %v439 = vld [vmem:[%s197 + $0x34] sm:$0xf]
      %v440 = vld [vmem:[%s197 + $0x38] sm:$0xf]
      %v441 = vld [vmem:[%s197 + $0x3c] sm:$0xf]
      %v442 = vld [vmem:[%s197 + $0x40] sm:$0x1]
      %s443 = scalar_lea.vmem %s1, 8
      %v444 = vld [vmem:[%s443] sm:$0xf]
      %v445 = vld [vmem:[%s443 + $0x4] sm:$0xf]
      %v463 = vunpack.c.l.b16 %v426
      %v464 = vunpack.c.l.b16 %v427
      %v465 = vunpack.c.l.b16 %v428
      %v466 = vunpack.c.l.b16 %v429
      %v467 = vunpack.c.l.b16 %v430
      %v468 = vunpack.c.l.b16 %v431
      %v469 = vunpack.c.l.b16 %v432
      %v470 = vunpack.c.l.b16 %v433
      %v471 = vunpack.c.l.b16 %v434
      %v472 = vunpack.c.l.b16 %v435
      %v473 = vunpack.c.l.b16 %v436
      %v474 = vunpack.c.l.b16 %v437
      %v475 = vunpack.c.l.b16 %v438
      %v476 = vunpack.c.l.b16 %v439
      %v477 = vunpack.c.l.b16 %v440
      %v478 = vunpack.c.l.b16 %v441
      %v479 = vunpack.c.l.b16 %v442
      %v480 = vpack.c.b16 %v464, %v463
      %v481 = vpack.c.b16 %v466, %v465
      %v482 = vpack.c.b16 %v468, %v467
      %v483 = vpack.c.b16 %v470, %v469
      %v484 = vpack.c.b16 %v472, %v471
      %v485 = vpack.c.b16 %v474, %v473
      %v486 = vpack.c.b16 %v476, %v475
      %v487 = vpack.c.b16 %v478, %v477
      %v488 = vpack.c.b16 %v479, %v479
      %vm489 = vsmask.f32 7424
      %v491 = vshrl.u32 %v480, 16
      %v493 = vshll.u32 %v480, 16
      %v495 = vrot.slane %v493, 1
      %v496 = vor.u32 %v491, %v495
      %v498 = vshll.u32 %v481, 16
      %v500 = vrot.slane %v498, 1
      %v501 = vsel %vm489, %v496, %v500
      %v502 = vshrl.u32 %v481, 16
      %v504 = vor.u32 %v502, %v500
      %v506 = vshll.u32 %v482, 16
      %v508 = vrot.slane %v506, 1
      %v509 = vsel %vm489, %v504, %v508
      %v510 = vshrl.u32 %v482, 16
      %v512 = vor.u32 %v510, %v508
      %v514 = vshll.u32 %v483, 16
      %v516 = vrot.slane %v514, 1
      %v517 = vsel %vm489, %v512, %v516
      %v518 = vshrl.u32 %v483, 16
      %v520 = vor.u32 %v518, %v516
      %v522 = vshll.u32 %v484, 16
      %v524 = vrot.slane %v522, 1
      %v525 = vsel %vm489, %v520, %v524
      %v526 = vshrl.u32 %v484, 16
      %v528 = vor.u32 %v526, %v524
      %v530 = vshll.u32 %v485, 16
      %v532 = vrot.slane %v530, 1
      %v533 = vsel %vm489, %v528, %v532
      %v534 = vshrl.u32 %v485, 16
      %v536 = vor.u32 %v534, %v532
      %v538 = vshll.u32 %v486, 16
      %v540 = vrot.slane %v538, 1
      %v541 = vsel %vm489, %v536, %v540
      %v542 = vshrl.u32 %v486, 16
      %v544 = vor.u32 %v542, %v540
      %v546 = vshll.u32 %v487, 16
      %v548 = vrot.slane %v546, 1
      %v549 = vsel %vm489, %v544, %v548
      %v550 = vshrl.u32 %v487, 16
      %v552 = vor.u32 %v550, %v548
      %v554 = vshll.u32 %v488, 16
      %v556 = vrot.slane %v554, 1
      %v557 = vsel %vm489, %v552, %v556
      %v560 = vunpack.c.l.b16 %v444
      %v561 = vunpack.c.l.b16 %v445
      %v562 = vpack.c.b16 %v561, %v560
      %v565 = vsel %vm272, %v501, 0
      %v568 = vsel %vm272, %v509, 0
      %v571 = vsel %vm272, %v517, 0
      %v574 = vsel %vm272, %v525, 0
      %v577 = vsel %vm272, %v533, 0
      %v580 = vsel %vm272, %v541, 0
      %v583 = vsel %vm272, %v549, 0
      %v586 = vsel %vm272, %v557, 0
      %588 = vmatprep.subr.bf16.mxu0 0
      %589 = vmatpush1.bf16.msra.mxu0 0
      %590 = vmatprep.subr.bf16.mxu0 0
      %591 = vmatpush1.bf16.msra.mxu0 0
      %592 = vmatprep.subr.bf16.mxu0 0
      %593 = vmatpush1.bf16.msra.mxu0 0
      %594 = vmatprep.subr.bf16.mxu0 0
      %595 = vmatpush1.bf16.msra.mxu0 0
      %596 = vmatprep.subr.bf16.mxu0 0
      %597 = vmatpush1.bf16.msra.mxu0 0
      %598 = vmatprep.subr.bf16.mxu0 0
      %599 = vmatpush1.bf16.msra.mxu0 0
      %600 = vmatprep.subr.bf16.mxu0 0
      %601 = vmatpush1.bf16.msra.mxu0 0
      %602 = vmatprep.subr.bf16.mxu0 0
      %603 = vmatpush1.bf16.msra.mxu0 %v562
      %604 = vmatprep.subr.bf16.mxu0 0
      %605 = vmatpush2.bf16.msra.mxu0 0
      %606 = vmatprep.subr.bf16.mxu0 0
      %607 = vmatpush2.bf16.msra.mxu0 0
      %608 = vmatprep.subr.bf16.mxu0 0
      %609 = vmatpush2.bf16.msra.mxu0 0
      %610 = vmatprep.subr.bf16.mxu0 0
      %611 = vmatpush2.bf16.msra.mxu0 0
      %612 = vmatprep.subr.bf16.mxu0 0
      %613 = vmatpush2.bf16.msra.mxu0 0
      %614 = vmatprep.subr.bf16.mxu0 0
      %615 = vmatpush2.bf16.msra.mxu0 0
      %616 = vmatprep.subr.bf16.mxu0 0
      %617 = vmatpush2.bf16.msra.mxu0 0
      %618 = vmatprep.subr.bf16.mxu0 0
      %619 = vmatpush2.bf16.msra.mxu0 0
      %620 = vmatprep.mubr.bf16.mxu0 0
      %621 = vmatmul.mubr.bf16.gmra.mxu0 %v565
      %v622 = vpop.f32.mrf.mxu0
      %v623 = vadd.f32 0.0, %v622
      %v624 = vpop.f32.mrf.mxu0
      %v625 = vpop.f32.mrf.mxu0
      %v626 = vadd.f32 0.0, %v625
      %v627 = vpop.f32.mrf.mxu0
      %628 = vmatprep.mubr.bf16.mxu0 0
      %629 = vmatmul.mubr.bf16.gmra.mxu0 %v568
      %v630 = vpop.f32.mrf.mxu0
      %v631 = vadd.f32 0.0, %v630
      %v632 = vpop.f32.mrf.mxu0
      %v633 = vpop.f32.mrf.mxu0
      %v634 = vadd.f32 0.0, %v633
      %v635 = vpop.f32.mrf.mxu0
      %636 = vmatprep.mubr.bf16.mxu0 0
      %637 = vmatmul.mubr.bf16.gmra.mxu0 %v571
      %v638 = vpop.f32.mrf.mxu0
      %v639 = vadd.f32 0.0, %v638
      %v640 = vpop.f32.mrf.mxu0
      %v641 = vpop.f32.mrf.mxu0
      %v642 = vadd.f32 0.0, %v641
      %v643 = vpop.f32.mrf.mxu0
      %644 = vmatprep.mubr.bf16.mxu0 0
      %645 = vmatmul.mubr.bf16.gmra.mxu0 %v574
      %v646 = vpop.f32.mrf.mxu0
      %v647 = vadd.f32 0.0, %v646
      %v648 = vpop.f32.mrf.mxu0
      %v649 = vpop.f32.mrf.mxu0
      %v650 = vadd.f32 0.0, %v649
      %v651 = vpop.f32.mrf.mxu0
      %652 = vmatprep.mubr.bf16.mxu0 0
      %653 = vmatmul.mubr.bf16.gmra.mxu0 %v577
      %v654 = vpop.f32.mrf.mxu0
      %v655 = vadd.f32 0.0, %v654
      %v656 = vpop.f32.mrf.mxu0
      %v657 = vpop.f32.mrf.mxu0
      %v658 = vadd.f32 0.0, %v657
      %v659 = vpop.f32.mrf.mxu0
      %660 = vmatprep.mubr.bf16.mxu0 0
      %661 = vmatmul.mubr.bf16.gmra.mxu0 %v580
      %v662 = vpop.f32.mrf.mxu0
      %v663 = vadd.f32 0.0, %v662
      %v664 = vpop.f32.mrf.mxu0
      %v665 = vpop.f32.mrf.mxu0
      %v666 = vadd.f32 0.0, %v665
      %v667 = vpop.f32.mrf.mxu0
      %668 = vmatprep.mubr.bf16.mxu0 0
      %669 = vmatmul.mubr.bf16.gmra.mxu0 %v583
      %v670 = vpop.f32.mrf.mxu0
      %v671 = vadd.f32 0.0, %v670
      %v672 = vpop.f32.mrf.mxu0
      %v673 = vpop.f32.mrf.mxu0
      %v674 = vadd.f32 0.0, %v673
      %v675 = vpop.f32.mrf.mxu0
      %676 = vmatprep.mubr.bf16.mxu0 0
      %677 = vmatmul.mubr.bf16.gmra.mxu0 %v586
      %v678 = vpop.f32.mrf.mxu0
      %v679 = vadd.f32 0.0, %v678
      %v680 = vpop.f32.mrf.mxu0
      %v681 = vpop.f32.mrf.mxu0
      %v682 = vadd.f32 0.0, %v681
      %v683 = vpop.f32.mrf.mxu0
      %684 = vdwg.mxu0
      %v685 = vadd.f32 %v410, %v623
      %v686 = vadd.f32 %v411, %v626
      %v687 = vadd.f32 %v412, %v631
      %v688 = vadd.f32 %v413, %v634
      %v689 = vadd.f32 %v414, %v639
      %v690 = vadd.f32 %v415, %v642
      %v691 = vadd.f32 %v416, %v647
      %v692 = vadd.f32 %v417, %v650
      %v693 = vadd.f32 %v418, %v655
      %v694 = vadd.f32 %v419, %v658
      %v695 = vadd.f32 %v420, %v663
      %v696 = vadd.f32 %v421, %v666
      %v697 = vadd.f32 %v422, %v671
      %v698 = vadd.f32 %v423, %v674
      %v699 = vadd.f32 %v424, %v679
      %v700 = vadd.f32 %v425, %v682
      %701 = vst [vmem:[#allocation2] sm:$0xff] %v685
      %702 = vst [vmem:[#allocation2 + $0x8] sm:$0xff] %v686
      %703 = vst [vmem:[#allocation2 + $0x10] sm:$0xff] %v687
      %704 = vst [vmem:[#allocation2 + $0x18] sm:$0xff] %v688
      %705 = vst [vmem:[#allocation2 + $0x20] sm:$0xff] %v689
      %706 = vst [vmem:[#allocation2 + $0x28] sm:$0xff] %v690
      %707 = vst [vmem:[#allocation2 + $0x30] sm:$0xff] %v691
      %708 = vst [vmem:[#allocation2 + $0x38] sm:$0xff] %v692
      %709 = vst [vmem:[#allocation2 + $0x40] sm:$0xff] %v693
      %710 = vst [vmem:[#allocation2 + $0x48] sm:$0xff] %v694
      %711 = vst [vmem:[#allocation2 + $0x50] sm:$0xff] %v695
      %712 = vst [vmem:[#allocation2 + $0x58] sm:$0xff] %v696
      %713 = vst [vmem:[#allocation2 + $0x60] sm:$0xff] %v697
      %714 = vst [vmem:[#allocation2 + $0x68] sm:$0xff] %v698
      %715 = vst [vmem:[#allocation2 + $0x70] sm:$0xff] %v699
      %716 = vst [vmem:[#allocation2 + $0x78] sm:$0xff] %v700
      %v717 = vld [vmem:[#allocation2] sm:$0xff]
      %v718 = vld [vmem:[#allocation2 + $0x8] sm:$0xff]
      %v719 = vld [vmem:[#allocation2 + $0x10] sm:$0xff]
      %v720 = vld [vmem:[#allocation2 + $0x18] sm:$0xff]
      %v721 = vld [vmem:[#allocation2 + $0x20] sm:$0xff]
      %v722 = vld [vmem:[#allocation2 + $0x28] sm:$0xff]
      %v723 = vld [vmem:[#allocation2 + $0x30] sm:$0xff]
      %v724 = vld [vmem:[#allocation2 + $0x38] sm:$0xff]
      %v725 = vld [vmem:[#allocation2 + $0x40] sm:$0xff]
      %v726 = vld [vmem:[#allocation2 + $0x48] sm:$0xff]
      %v727 = vld [vmem:[#allocation2 + $0x50] sm:$0xff]
      %v728 = vld [vmem:[#allocation2 + $0x58] sm:$0xff]
      %v729 = vld [vmem:[#allocation2 + $0x60] sm:$0xff]
      %v730 = vld [vmem:[#allocation2 + $0x68] sm:$0xff]
      %v731 = vld [vmem:[#allocation2 + $0x70] sm:$0xff]
      %v732 = vld [vmem:[#allocation2 + $0x78] sm:$0xff]
      %v733 = vld [vmem:[%s197] sm:$0xe]
      %v734 = vld [vmem:[%s197 + $0x4] sm:$0xf]
      %v735 = vld [vmem:[%s197 + $0x8] sm:$0xf]
      %v736 = vld [vmem:[%s197 + $0xc] sm:$0xf]
      %v737 = vld [vmem:[%s197 + $0x10] sm:$0xf]
      %v738 = vld [vmem:[%s197 + $0x14] sm:$0xf]
      %v739 = vld [vmem:[%s197 + $0x18] sm:$0xf]
      %v740 = vld [vmem:[%s197 + $0x1c] sm:$0xf]
      %v741 = vld [vmem:[%s197 + $0x20] sm:$0xf]
      %v742 = vld [vmem:[%s197 + $0x24] sm:$0xf]
      %v743 = vld [vmem:[%s197 + $0x28] sm:$0xf]
      %v744 = vld [vmem:[%s197 + $0x2c] sm:$0xf]
      %v745 = vld [vmem:[%s197 + $0x30] sm:$0xf]
      %v746 = vld [vmem:[%s197 + $0x34] sm:$0xf]
      %v747 = vld [vmem:[%s197 + $0x38] sm:$0xf]
      %v748 = vld [vmem:[%s197 + $0x3c] sm:$0xf]
      %v749 = vld [vmem:[%s197 + $0x40] sm:$0x1]
      %s750 = scalar_lea.vmem %s1, 16
      %v751 = vld [vmem:[%s750] sm:$0xf]
      %v752 = vld [vmem:[%s750 + $0x4] sm:$0xf]
      %v770 = vunpack.c.l.b16 %v733
      %v771 = vunpack.c.l.b16 %v734
      %v772 = vunpack.c.l.b16 %v735
      %v773 = vunpack.c.l.b16 %v736
      %v774 = vunpack.c.l.b16 %v737
      %v775 = vunpack.c.l.b16 %v738
      %v776 = vunpack.c.l.b16 %v739
      %v777 = vunpack.c.l.b16 %v740
      %v778 = vunpack.c.l.b16 %v741
      %v779 = vunpack.c.l.b16 %v742
      %v780 = vunpack.c.l.b16 %v743
      %v781 = vunpack.c.l.b16 %v744
      %v782 = vunpack.c.l.b16 %v745
      %v783 = vunpack.c.l.b16 %v746
      %v784 = vunpack.c.l.b16 %v747
      %v785 = vunpack.c.l.b16 %v748
      %v786 = vunpack.c.l.b16 %v749
      %v787 = vpack.c.b16 %v771, %v770
      %v788 = vpack.c.b16 %v773, %v772
      %v789 = vpack.c.b16 %v775, %v774
      %v790 = vpack.c.b16 %v777, %v776
      %v791 = vpack.c.b16 %v779, %v778
      %v792 = vpack.c.b16 %v781, %v780
      %v793 = vpack.c.b16 %v783, %v782
      %v794 = vpack.c.b16 %v785, %v784
      %v795 = vpack.c.b16 %v786, %v786
      %vm796 = vcmask 1046528
      %v797 = vrot.slane %v787, 1
      %v798 = vrot.slane %v788, 1
      %v799 = vsel %vm796, %v797, %v798
      %v800 = vrot.slane %v789, 1
      %v801 = vsel %vm796, %v798, %v800
      %v802 = vrot.slane %v790, 1
      %v803 = vsel %vm796, %v800, %v802
      %v804 = vrot.slane %v791, 1
      %v805 = vsel %vm796, %v802, %v804
      %v806 = vrot.slane %v792, 1
      %v807 = vsel %vm796, %v804, %v806
      %v808 = vrot.slane %v793, 1
      %v809 = vsel %vm796, %v806, %v808
      %v810 = vrot.slane %v794, 1
      %v811 = vsel %vm796, %v808, %v810
      %v812 = vrot.slane %v795, 1
      %v813 = vsel %vm796, %v810, %v812
      %v816 = vunpack.c.l.b16 %v751
      %v817 = vunpack.c.l.b16 %v752
      %v818 = vpack.c.b16 %v817, %v816
      %v821 = vsel %vm272, %v799, 0
      %v824 = vsel %vm272, %v801, 0
      %v827 = vsel %vm272, %v803, 0
      %v830 = vsel %vm272, %v805, 0
      %v833 = vsel %vm272, %v807, 0
      %v836 = vsel %vm272, %v809, 0
      %v839 = vsel %vm272, %v811, 0
      %v842 = vsel %vm272, %v813, 0
      %844 = vmatprep.subr.bf16.mxu0 0
      %845 = vmatpush1.bf16.msra.mxu0 0
      %846 = vmatprep.subr.bf16.mxu0 0
      %847 = vmatpush1.bf16.msra.mxu0 0
      %848 = vmatprep.subr.bf16.mxu0 0
      %849 = vmatpush1.bf16.msra.mxu0 0
      %850 = vmatprep.subr.bf16.mxu0 0
      %851 = vmatpush1.bf16.msra.mxu0 0
      %852 = vmatprep.subr.bf16.mxu0 0
      %853 = vmatpush1.bf16.msra.mxu0 0
      %854 = vmatprep.subr.bf16.mxu0 0
      %855 = vmatpush1.bf16.msra.mxu0 0
      %856 = vmatprep.subr.bf16.mxu0 0
      %857 = vmatpush1.bf16.msra.mxu0 0
      %858 = vmatprep.subr.bf16.mxu0 0
      %859 = vmatpush1.bf16.msra.mxu0 %v818
      %860 = vmatprep.subr.bf16.mxu0 0
      %861 = vmatpush2.bf16.msra.mxu0 0
      %862 = vmatprep.subr.bf16.mxu0 0
      %863 = vmatpush2.bf16.msra.mxu0 0
      %864 = vmatprep.subr.bf16.mxu0 0
      %865 = vmatpush2.bf16.msra.mxu0 0
      %866 = vmatprep.subr.bf16.mxu0 0
      %867 = vmatpush2.bf16.msra.mxu0 0
      %868 = vmatprep.subr.bf16.mxu0 0
      %869 = vmatpush2.bf16.msra.mxu0 0
      %870 = vmatprep.subr.bf16.mxu0 0
      %871 = vmatpush2.bf16.msra.mxu0 0
      %872 = vmatprep.subr.bf16.mxu0 0
      %873 = vmatpush2.bf16.msra.mxu0 0
      %874 = vmatprep.subr.bf16.mxu0 0
      %875 = vmatpush2.bf16.msra.mxu0 0
      %876 = vmatprep.mubr.bf16.mxu0 0
      %877 = vmatmul.mubr.bf16.gmra.mxu0 %v821
      %v878 = vpop.f32.mrf.mxu0
      %v879 = vadd.f32 0.0, %v878
      %v880 = vpop.f32.mrf.mxu0
      %v881 = vpop.f32.mrf.mxu0
      %v882 = vadd.f32 0.0, %v881
      %v883 = vpop.f32.mrf.mxu0
      %884 = vmatprep.mubr.bf16.mxu0 0
      %885 = vmatmul.mubr.bf16.gmra.mxu0 %v824
      %v886 = vpop.f32.mrf.mxu0
      %v887 = vadd.f32 0.0, %v886
      %v888 = vpop.f32.mrf.mxu0
      %v889 = vpop.f32.mrf.mxu0
      %v890 = vadd.f32 0.0, %v889
      %v891 = vpop.f32.mrf.mxu0
      %892 = vmatprep.mubr.bf16.mxu0 0
      %893 = vmatmul.mubr.bf16.gmra.mxu0 %v827
      %v894 = vpop.f32.mrf.mxu0
      %v895 = vadd.f32 0.0, %v894
      %v896 = vpop.f32.mrf.mxu0
      %v897 = vpop.f32.mrf.mxu0
      %v898 = vadd.f32 0.0, %v897
      %v899 = vpop.f32.mrf.mxu0
      %900 = vmatprep.mubr.bf16.mxu0 0
      %901 = vmatmul.mubr.bf16.gmra.mxu0 %v830
      %v902 = vpop.f32.mrf.mxu0
      %v903 = vadd.f32 0.0, %v902
      %v904 = vpop.f32.mrf.mxu0
      %v905 = vpop.f32.mrf.mxu0
      %v906 = vadd.f32 0.0, %v905
      %v907 = vpop.f32.mrf.mxu0
      %908 = vmatprep.mubr.bf16.mxu0 0
      %909 = vmatmul.mubr.bf16.gmra.mxu0 %v833
      %v910 = vpop.f32.mrf.mxu0
      %v911 = vadd.f32 0.0, %v910
      %v912 = vpop.f32.mrf.mxu0
      %v913 = vpop.f32.mrf.mxu0
      %v914 = vadd.f32 0.0, %v913
      %v915 = vpop.f32.mrf.mxu0
      %916 = vmatprep.mubr.bf16.mxu0 0
      %917 = vmatmul.mubr.bf16.gmra.mxu0 %v836
      %v918 = vpop.f32.mrf.mxu0
      %v919 = vadd.f32 0.0, %v918
      %v920 = vpop.f32.mrf.mxu0
      %v921 = vpop.f32.mrf.mxu0
      %v922 = vadd.f32 0.0, %v921
      %v923 = vpop.f32.mrf.mxu0
      %924 = vmatprep.mubr.bf16.mxu0 0
      %925 = vmatmul.mubr.bf16.gmra.mxu0 %v839
      %v926 = vpop.f32.mrf.mxu0
      %v927 = vadd.f32 0.0, %v926
      %v928 = vpop.f32.mrf.mxu0
      %v929 = vpop.f32.mrf.mxu0
      %v930 = vadd.f32 0.0, %v929
      %v931 = vpop.f32.mrf.mxu0
      %932 = vmatprep.mubr.bf16.mxu0 0
      %933 = vmatmul.mubr.bf16.gmra.mxu0 %v842
      %v934 = vpop.f32.mrf.mxu0
      %v935 = vadd.f32 0.0, %v934
      %v936 = vpop.f32.mrf.mxu0
      %v937 = vpop.f32.mrf.mxu0
      %v938 = vadd.f32 0.0, %v937
      %v939 = vpop.f32.mrf.mxu0
      %940 = vdwg.mxu0
      %v941 = vadd.f32 %v717, %v879
      %v942 = vadd.f32 %v718, %v882
      %v943 = vadd.f32 %v719, %v887
      %v944 = vadd.f32 %v720, %v890
      %v945 = vadd.f32 %v721, %v895
      %v946 = vadd.f32 %v722, %v898
      %v947 = vadd.f32 %v723, %v903
      %v948 = vadd.f32 %v724, %v906
      %v949 = vadd.f32 %v725, %v911
      %v950 = vadd.f32 %v726, %v914
      %v951 = vadd.f32 %v727, %v919
      %v952 = vadd.f32 %v728, %v922
      %v953 = vadd.f32 %v729, %v927
      %v954 = vadd.f32 %v730, %v930
      %v955 = vadd.f32 %v731, %v935
      %v956 = vadd.f32 %v732, %v938
      %957 = vst [vmem:[#allocation2] sm:$0xff] %v941
      %958 = vst [vmem:[#allocation2 + $0x8] sm:$0xff] %v942
      %959 = vst [vmem:[#allocation2 + $0x10] sm:$0xff] %v943
      %960 = vst [vmem:[#allocation2 + $0x18] sm:$0xff] %v944
      %961 = vst [vmem:[#allocation2 + $0x20] sm:$0xff] %v945
      %962 = vst [vmem:[#allocation2 + $0x28] sm:$0xff] %v946
      %963 = vst [vmem:[#allocation2 + $0x30] sm:$0xff] %v947
      %964 = vst [vmem:[#allocation2 + $0x38] sm:$0xff] %v948
      %965 = vst [vmem:[#allocation2 + $0x40] sm:$0xff] %v949
      %966 = vst [vmem:[#allocation2 + $0x48] sm:$0xff] %v950
      %967 = vst [vmem:[#allocation2 + $0x50] sm:$0xff] %v951
      %968 = vst [vmem:[#allocation2 + $0x58] sm:$0xff] %v952
      %969 = vst [vmem:[#allocation2 + $0x60] sm:$0xff] %v953
      %970 = vst [vmem:[#allocation2 + $0x68] sm:$0xff] %v954
      %971 = vst [vmem:[#allocation2 + $0x70] sm:$0xff] %v955
      %972 = vst [vmem:[#allocation2 + $0x78] sm:$0xff] %v956
      %v973 = vld [vmem:[#allocation2] sm:$0xff]
      %v974 = vld [vmem:[#allocation2 + $0x8] sm:$0xff]
      %v975 = vld [vmem:[#allocation2 + $0x10] sm:$0xff]
      %v976 = vld [vmem:[#allocation2 + $0x18] sm:$0xff]
      %v977 = vld [vmem:[#allocation2 + $0x20] sm:$0xff]
      %v978 = vld [vmem:[#allocation2 + $0x28] sm:$0xff]
      %v979 = vld [vmem:[#allocation2 + $0x30] sm:$0xff]
      %v980 = vld [vmem:[#allocation2 + $0x38] sm:$0xff]
      %v981 = vld [vmem:[#allocation2 + $0x40] sm:$0xff]
      %v982 = vld [vmem:[#allocation2 + $0x48] sm:$0xff]
      %v983 = vld [vmem:[#allocation2 + $0x50] sm:$0xff]
      %v984 = vld [vmem:[#allocation2 + $0x58] sm:$0xff]
      %v985 = vld [vmem:[#allocation2 + $0x60] sm:$0xff]
      %v986 = vld [vmem:[#allocation2 + $0x68] sm:$0xff]
      %v987 = vld [vmem:[#allocation2 + $0x70] sm:$0xff]
      %v988 = vld [vmem:[#allocation2 + $0x78] sm:$0xff]
      %v989 = vld [vmem:[%s197 + $0x8] sm:$0xf]
      %v990 = vld [vmem:[%s197 + $0xc] sm:$0xf]
      %v991 = vld [vmem:[%s197 + $0x10] sm:$0xf]
      %v992 = vld [vmem:[%s197 + $0x14] sm:$0xf]
      %v993 = vld [vmem:[%s197 + $0x18] sm:$0xf]
      %v994 = vld [vmem:[%s197 + $0x1c] sm:$0xf]
      %v995 = vld [vmem:[%s197 + $0x20] sm:$0xf]
      %v996 = vld [vmem:[%s197 + $0x24] sm:$0xf]
      %v997 = vld [vmem:[%s197 + $0x28] sm:$0xf]
      %v998 = vld [vmem:[%s197 + $0x2c] sm:$0xf]
      %v999 = vld [vmem:[%s197 + $0x30] sm:$0xf]
      %v1000 = vld [vmem:[%s197 + $0x34] sm:$0xf]
      %v1001 = vld [vmem:[%s197 + $0x38] sm:$0xf]
      %v1002 = vld [vmem:[%s197 + $0x3c] sm:$0xf]
      %v1003 = vld [vmem:[%s197 + $0x40] sm:$0xf]
      %v1004 = vld [vmem:[%s197 + $0x44] sm:$0xf]
      %s1005 = scalar_lea.vmem %s1, 24
      %v1006 = vld [vmem:[%s1005] sm:$0xf]
      %v1007 = vld [vmem:[%s1005 + $0x4] sm:$0xf]
      %v1024 = vunpack.c.l.b16 %v989
      %v1025 = vunpack.c.l.b16 %v990
      %v1026 = vunpack.c.l.b16 %v991
      %v1027 = vunpack.c.l.b16 %v992
      %v1028 = vunpack.c.l.b16 %v993
      %v1029 = vunpack.c.l.b16 %v994
      %v1030 = vunpack.c.l.b16 %v995
      %v1031 = vunpack.c.l.b16 %v996
      %v1032 = vunpack.c.l.b16 %v997
      %v1033 = vunpack.c.l.b16 %v998
      %v1034 = vunpack.c.l.b16 %v999
      %v1035 = vunpack.c.l.b16 %v1000
      %v1036 = vunpack.c.l.b16 %v1001
      %v1037 = vunpack.c.l.b16 %v1002
      %v1038 = vunpack.c.l.b16 %v1003
      %v1039 = vunpack.c.l.b16 %v1004
      %v1040 = vpack.c.b16 %v1025, %v1024
      %v1041 = vpack.c.b16 %v1027, %v1026
      %v1042 = vpack.c.b16 %v1029, %v1028
      %v1043 = vpack.c.b16 %v1031, %v1030
      %v1044 = vpack.c.b16 %v1033, %v1032
      %v1045 = vpack.c.b16 %v1035, %v1034
      %v1046 = vpack.c.b16 %v1037, %v1036
      %v1047 = vpack.c.b16 %v1039, %v1038
      %v1050 = vunpack.c.l.b16 %v1006
      %v1051 = vunpack.c.l.b16 %v1007
      %v1052 = vpack.c.b16 %v1051, %v1050
      %v1055 = vsel %vm272, %v1040, 0
      %v1058 = vsel %vm272, %v1041, 0
      %v1061 = vsel %vm272, %v1042, 0
      %v1064 = vsel %vm272, %v1043, 0
      %v1067 = vsel %vm272, %v1044, 0
      %v1070 = vsel %vm272, %v1045, 0
      %v1073 = vsel %vm272, %v1046, 0
      %v1076 = vsel %vm272, %v1047, 0
      %1078 = vmatprep.subr.bf16.mxu0 0
      %1079 = vmatpush1.bf16.msra.mxu0 0
      %1080 = vmatprep.subr.bf16.mxu0 0
      %1081 = vmatpush1.bf16.msra.mxu0 0
      %1082 = vmatprep.subr.bf16.mxu0 0
      %1083 = vmatpush1.bf16.msra.mxu0 0
      %1084 = vmatprep.subr.bf16.mxu0 0
      %1085 = vmatpush1.bf16.msra.mxu0 0
      %1086 = vmatprep.subr.bf16.mxu0 0
      %1087 = vmatpush1.bf16.msra.mxu0 0
      %1088 = vmatprep.subr.bf16.mxu0 0
      %1089 = vmatpush1.bf16.msra.mxu0 0
      %1090 = vmatprep.subr.bf16.mxu0 0
      %1091 = vmatpush1.bf16.msra.mxu0 0
      %1092 = vmatprep.subr.bf16.mxu0 0
      %1093 = vmatpush1.bf16.msra.mxu0 %v1052
      %1094 = vmatprep.subr.bf16.mxu0 0
      %1095 = vmatpush2.bf16.msra.mxu0 0
      %1096 = vmatprep.subr.bf16.mxu0 0
      %1097 = vmatpush2.bf16.msra.mxu0 0
      %1098 = vmatprep.subr.bf16.mxu0 0
      %1099 = vmatpush2.bf16.msra.mxu0 0
      %1100 = vmatprep.subr.bf16.mxu0 0
      %1101 = vmatpush2.bf16.msra.mxu0 0
      %1102 = vmatprep.subr.bf16.mxu0 0
      %1103 = vmatpush2.bf16.msra.mxu0 0
      %1104 = vmatprep.subr.bf16.mxu0 0
      %1105 = vmatpush2.bf16.msra.mxu0 0
      %1106 = vmatprep.subr.bf16.mxu0 0
      %1107 = vmatpush2.bf16.msra.mxu0 0
      %1108 = vmatprep.subr.bf16.mxu0 0
      %1109 = vmatpush2.bf16.msra.mxu0 0
      %1110 = vmatprep.mubr.bf16.mxu0 0
      %1111 = vmatmul.mubr.bf16.gmra.mxu0 %v1055
      %v1112 = vpop.f32.mrf.mxu0
      %v1113 = vadd.f32 0.0, %v1112
      %v1114 = vpop.f32.mrf.mxu0
      %v1115 = vpop.f32.mrf.mxu0
      %v1116 = vadd.f32 0.0, %v1115
      %v1117 = vpop.f32.mrf.mxu0
      %1118 = vmatprep.mubr.bf16.mxu0 0
      %1119 = vmatmul.mubr.bf16.gmra.mxu0 %v1058
      %v1120 = vpop.f32.mrf.mxu0
      %v1121 = vadd.f32 0.0, %v1120
      %v1122 = vpop.f32.mrf.mxu0
      %v1123 = vpop.f32.mrf.mxu0
      %v1124 = vadd.f32 0.0, %v1123
      %v1125 = vpop.f32.mrf.mxu0
      %1126 = vmatprep.mubr.bf16.mxu0 0
      %1127 = vmatmul.mubr.bf16.gmra.mxu0 %v1061
      %v1128 = vpop.f32.mrf.mxu0
      %v1129 = vadd.f32 0.0, %v1128
      %v1130 = vpop.f32.mrf.mxu0
      %v1131 = vpop.f32.mrf.mxu0
      %v1132 = vadd.f32 0.0, %v1131
      %v1133 = vpop.f32.mrf.mxu0
      %1134 = vmatprep.mubr.bf16.mxu0 0
      %1135 = vmatmul.mubr.bf16.gmra.mxu0 %v1064
      %v1136 = vpop.f32.mrf.mxu0
      %v1137 = vadd.f32 0.0, %v1136
      %v1138 = vpop.f32.mrf.mxu0
      %v1139 = vpop.f32.mrf.mxu0
      %v1140 = vadd.f32 0.0, %v1139
      %v1141 = vpop.f32.mrf.mxu0
      %1142 = vmatprep.mubr.bf16.mxu0 0
      %1143 = vmatmul.mubr.bf16.gmra.mxu0 %v1067
      %v1144 = vpop.f32.mrf.mxu0
      %v1145 = vadd.f32 0.0, %v1144
      %v1146 = vpop.f32.mrf.mxu0
      %v1147 = vpop.f32.mrf.mxu0
      %v1148 = vadd.f32 0.0, %v1147
      %v1149 = vpop.f32.mrf.mxu0
      %1150 = vmatprep.mubr.bf16.mxu0 0
      %1151 = vmatmul.mubr.bf16.gmra.mxu0 %v1070
      %v1152 = vpop.f32.mrf.mxu0
      %v1153 = vadd.f32 0.0, %v1152
      %v1154 = vpop.f32.mrf.mxu0
      %v1155 = vpop.f32.mrf.mxu0
      %v1156 = vadd.f32 0.0, %v1155
      %v1157 = vpop.f32.mrf.mxu0
      %1158 = vmatprep.mubr.bf16.mxu0 0
      %1159 = vmatmul.mubr.bf16.gmra.mxu0 %v1073
      %v1160 = vpop.f32.mrf.mxu0
      %v1161 = vadd.f32 0.0, %v1160
      %v1162 = vpop.f32.mrf.mxu0
      %v1163 = vpop.f32.mrf.mxu0
      %v1164 = vadd.f32 0.0, %v1163
      %v1165 = vpop.f32.mrf.mxu0
      %1166 = vmatprep.mubr.bf16.mxu0 0
      %1167 = vmatmul.mubr.bf16.gmra.mxu0 %v1076
      %v1168 = vpop.f32.mrf.mxu0
      %v1169 = vadd.f32 0.0, %v1168
      %v1170 = vpop.f32.mrf.mxu0
      %v1171 = vpop.f32.mrf.mxu0
      %v1172 = vadd.f32 0.0, %v1171
      %v1173 = vpop.f32.mrf.mxu0
      %1174 = vdwg.mxu0
      %v1175 = vadd.f32 %v973, %v1113
      %v1176 = vadd.f32 %v974, %v1116
      %v1177 = vadd.f32 %v975, %v1121
      %v1178 = vadd.f32 %v976, %v1124
      %v1179 = vadd.f32 %v977, %v1129
      %v1180 = vadd.f32 %v978, %v1132
      %v1181 = vadd.f32 %v979, %v1137
      %v1182 = vadd.f32 %v980, %v1140
      %v1183 = vadd.f32 %v981, %v1145
      %v1184 = vadd.f32 %v982, %v1148
      %v1185 = vadd.f32 %v983, %v1153
      %v1186 = vadd.f32 %v984, %v1156
      %v1187 = vadd.f32 %v985, %v1161
      %v1188 = vadd.f32 %v986, %v1164
      %v1189 = vadd.f32 %v987, %v1169
      %v1190 = vadd.f32 %v988, %v1172
      %1191 = vst [vmem:[#allocation2] sm:$0xff] %v1175
      %1192 = vst [vmem:[#allocation2 + $0x8] sm:$0xff] %v1176
      %1193 = vst [vmem:[#allocation2 + $0x10] sm:$0xff] %v1177
      %1194 = vst [vmem:[#allocation2 + $0x18] sm:$0xff] %v1178
      %1195 = vst [vmem:[#allocation2 + $0x20] sm:$0xff] %v1179
      %1196 = vst [vmem:[#allocation2 + $0x28] sm:$0xff] %v1180
      %1197 = vst [vmem:[#allocation2 + $0x30] sm:$0xff] %v1181
      %1198 = vst [vmem:[#allocation2 + $0x38] sm:$0xff] %v1182
      %1199 = vst [vmem:[#allocation2 + $0x40] sm:$0xff] %v1183
      %1200 = vst [vmem:[#allocation2 + $0x48] sm:$0xff] %v1184
      %1201 = vst [vmem:[#allocation2 + $0x50] sm:$0xff] %v1185
      %1202 = vst [vmem:[#allocation2 + $0x58] sm:$0xff] %v1186
      %1203 = vst [vmem:[#allocation2 + $0x60] sm:$0xff] %v1187
      %1204 = vst [vmem:[#allocation2 + $0x68] sm:$0xff] %v1188
      %1205 = vst [vmem:[#allocation2 + $0x70] sm:$0xff] %v1189
      %1206 = vst [vmem:[#allocation2 + $0x78] sm:$0xff] %v1190
      %v1207 = vld [vmem:[#allocation2] sm:$0xff]
      %v1208 = vld [vmem:[#allocation2 + $0x8] sm:$0xff]
      %v1209 = vld [vmem:[#allocation2 + $0x10] sm:$0xff]
      %v1210 = vld [vmem:[#allocation2 + $0x18] sm:$0xff]
      %v1211 = vld [vmem:[#allocation2 + $0x20] sm:$0xff]
      %v1212 = vld [vmem:[#allocation2 + $0x28] sm:$0xff]
      %v1213 = vld [vmem:[#allocation2 + $0x30] sm:$0xff]
      %v1214 = vld [vmem:[#allocation2 + $0x38] sm:$0xff]
      %v1215 = vld [vmem:[#allocation2 + $0x40] sm:$0xff]
      %v1216 = vld [vmem:[#allocation2 + $0x48] sm:$0xff]
      %v1217 = vld [vmem:[#allocation2 + $0x50] sm:$0xff]
      %v1218 = vld [vmem:[#allocation2 + $0x58] sm:$0xff]
      %v1219 = vld [vmem:[#allocation2 + $0x60] sm:$0xff]
      %v1220 = vld [vmem:[#allocation2 + $0x68] sm:$0xff]
      %v1221 = vld [vmem:[#allocation2 + $0x70] sm:$0xff]
      %v1222 = vld [vmem:[#allocation2 + $0x78] sm:$0xff]
      %v1223 = vld [vmem:[%s197 + $0x8] sm:$0xf]
      %v1224 = vld [vmem:[%s197 + $0xc] sm:$0xf]
      %v1225 = vld [vmem:[%s197 + $0x10] sm:$0xf]
      %v1226 = vld [vmem:[%s197 + $0x14] sm:$0xf]
      %v1227 = vld [vmem:[%s197 + $0x18] sm:$0xf]
      %v1228 = vld [vmem:[%s197 + $0x1c] sm:$0xf]
      %v1229 = vld [vmem:[%s197 + $0x20] sm:$0xf]
      %v1230 = vld [vmem:[%s197 + $0x24] sm:$0xf]
      %v1231 = vld [vmem:[%s197 + $0x28] sm:$0xf]
      %v1232 = vld [vmem:[%s197 + $0x2c] sm:$0xf]
      %v1233 = vld [vmem:[%s197 + $0x30] sm:$0xf]
      %v1234 = vld [vmem:[%s197 + $0x34] sm:$0xf]
      %v1235 = vld [vmem:[%s197 + $0x38] sm:$0xf]
      %v1236 = vld [vmem:[%s197 + $0x3c] sm:$0xf]
      %v1237 = vld [vmem:[%s197 + $0x40] sm:$0xf]
      %v1238 = vld [vmem:[%s197 + $0x44] sm:$0xf]
      %v1239 = vld [vmem:[%s197 + $0x48] sm:$0x1]
      %s1240 = scalar_lea.vmem %s1, 32
      %v1241 = vld [vmem:[%s1240] sm:$0xf]
      %v1242 = vld [vmem:[%s1240 + $0x4] sm:$0xf]
      %v1260 = vunpack.c.l.b16 %v1223
      %v1261 = vunpack.c.l.b16 %v1224
      %v1262 = vunpack.c.l.b16 %v1225
      %v1263 = vunpack.c.l.b16 %v1226
      %v1264 = vunpack.c.l.b16 %v1227
      %v1265 = vunpack.c.l.b16 %v1228
      %v1266 = vunpack.c.l.b16 %v1229
      %v1267 = vunpack.c.l.b16 %v1230
      %v1268 = vunpack.c.l.b16 %v1231
      %v1269 = vunpack.c.l.b16 %v1232
      %v1270 = vunpack.c.l.b16 %v1233
      %v1271 = vunpack.c.l.b16 %v1234
      %v1272 = vunpack.c.l.b16 %v1235
      %v1273 = vunpack.c.l.b16 %v1236
      %v1274 = vunpack.c.l.b16 %v1237
      %v1275 = vunpack.c.l.b16 %v1238
      %v1276 = vunpack.c.l.b16 %v1239
      %v1277 = vpack.c.b16 %v1261, %v1260
      %v1278 = vpack.c.b16 %v1263, %v1262
      %v1279 = vpack.c.b16 %v1265, %v1264
      %v1280 = vpack.c.b16 %v1267, %v1266
      %v1281 = vpack.c.b16 %v1269, %v1268
      %v1282 = vpack.c.b16 %v1271, %v1270
      %v1283 = vpack.c.b16 %v1273, %v1272
      %v1284 = vpack.c.b16 %v1275, %v1274
      %v1285 = vpack.c.b16 %v1276, %v1276
      %v1287 = vshrl.u32 %v1277, 16
      %v1289 = vshll.u32 %v1277, 16
      %v1291 = vrot.slane %v1289, 1
      %v1292 = vor.u32 %v1287, %v1291
      %v1294 = vshll.u32 %v1278, 16
      %v1296 = vrot.slane %v1294, 1
      %v1297 = vsel %vm489, %v1292, %v1296
      %v1298 = vshrl.u32 %v1278, 16
      %v1300 = vor.u32 %v1298, %v1296
      %v1302 = vshll.u32 %v1279, 16
      %v1304 = vrot.slane %v1302, 1
      %v1305 = vsel %vm489, %v1300, %v1304
      %v1306 = vshrl.u32 %v1279, 16
      %v1308 = vor.u32 %v1306, %v1304
      %v1310 = vshll.u32 %v1280, 16
      %v1312 = vrot.slane %v1310, 1
      %v1313 = vsel %vm489, %v1308, %v1312
      %v1314 = vshrl.u32 %v1280, 16
      %v1316 = vor.u32 %v1314, %v1312
      %v1318 = vshll.u32 %v1281, 16
      %v1320 = vrot.slane %v1318, 1
      %v1321 = vsel %vm489, %v1316, %v1320
      %v1322 = vshrl.u32 %v1281, 16
      %v1324 = vor.u32 %v1322, %v1320
      %v1326 = vshll.u32 %v1282, 16
      %v1328 = vrot.slane %v1326, 1
      %v1329 = vsel %vm489, %v1324, %v1328
      %v1330 = vshrl.u32 %v1282, 16
      %v1332 = vor.u32 %v1330, %v1328
      %v1334 = vshll.u32 %v1283, 16
      %v1336 = vrot.slane %v1334, 1
      %v1337 = vsel %vm489, %v1332, %v1336
      %v1338 = vshrl.u32 %v1283, 16
      %v1340 = vor.u32 %v1338, %v1336
      %v1342 = vshll.u32 %v1284, 16
      %v1344 = vrot.slane %v1342, 1
      %v1345 = vsel %vm489, %v1340, %v1344
      %v1346 = vshrl.u32 %v1284, 16
      %v1348 = vor.u32 %v1346, %v1344
      %v1350 = vshll.u32 %v1285, 16
      %v1352 = vrot.slane %v1350, 1
      %v1353 = vsel %vm489, %v1348, %v1352
      %v1356 = vunpack.c.l.b16 %v1241
      %v1357 = vunpack.c.l.b16 %v1242
      %v1358 = vpack.c.b16 %v1357, %v1356
      %v1361 = vsel %vm272, %v1297, 0
      %v1364 = vsel %vm272, %v1305, 0
      %v1367 = vsel %vm272, %v1313, 0
      %v1370 = vsel %vm272, %v1321, 0
      %v1373 = vsel %vm272, %v1329, 0
      %v1376 = vsel %vm272, %v1337, 0
      %v1379 = vsel %vm272, %v1345, 0
      %v1382 = vsel %vm272, %v1353, 0
      %1384 = vmatprep.subr.bf16.mxu0 0
      %1385 = vmatpush1.bf16.msra.mxu0 0
      %1386 = vmatprep.subr.bf16.mxu0 0
      %1387 = vmatpush1.bf16.msra.mxu0 0
      %1388 = vmatprep.subr.bf16.mxu0 0
      %1389 = vmatpush1.bf16.msra.mxu0 0
      %1390 = vmatprep.subr.bf16.mxu0 0
      %1391 = vmatpush1.bf16.msra.mxu0 0
      %1392 = vmatprep.subr.bf16.mxu0 0
      %1393 = vmatpush1.bf16.msra.mxu0 0
      %1394 = vmatprep.subr.bf16.mxu0 0
      %1395 = vmatpush1.bf16.msra.mxu0 0
      %1396 = vmatprep.subr.bf16.mxu0 0
      %1397 = vmatpush1.bf16.msra.mxu0 0
      %1398 = vmatprep.subr.bf16.mxu0 0
      %1399 = vmatpush1.bf16.msra.mxu0 %v1358
      %1400 = vmatprep.subr.bf16.mxu0 0
      %1401 = vmatpush2.bf16.msra.mxu0 0
      %1402 = vmatprep.subr.bf16.mxu0 0
      %1403 = vmatpush2.bf16.msra.mxu0 0
      %1404 = vmatprep.subr.bf16.mxu0 0
      %1405 = vmatpush2.bf16.msra.mxu0 0
      %1406 = vmatprep.subr.bf16.mxu0 0
      %1407 = vmatpush2.bf16.msra.mxu0 0
      %1408 = vmatprep.subr.bf16.mxu0 0
      %1409 = vmatpush2.bf16.msra.mxu0 0
      %1410 = vmatprep.subr.bf16.mxu0 0
      %1411 = vmatpush2.bf16.msra.mxu0 0
      %1412 = vmatprep.subr.bf16.mxu0 0
      %1413 = vmatpush2.bf16.msra.mxu0 0
      %1414 = vmatprep.subr.bf16.mxu0 0
      %1415 = vmatpush2.bf16.msra.mxu0 0
      %1416 = vmatprep.mubr.bf16.mxu0 0
      %1417 = vmatmul.mubr.bf16.gmra.mxu0 %v1361
      %v1418 = vpop.f32.mrf.mxu0
      %v1419 = vadd.f32 0.0, %v1418
      %v1420 = vpop.f32.mrf.mxu0
      %v1421 = vpop.f32.mrf.mxu0
      %v1422 = vadd.f32 0.0, %v1421
      %v1423 = vpop.f32.mrf.mxu0
      %1424 = vmatprep.mubr.bf16.mxu0 0
      %1425 = vmatmul.mubr.bf16.gmra.mxu0 %v1364
      %v1426 = vpop.f32.mrf.mxu0
      %v1427 = vadd.f32 0.0, %v1426
      %v1428 = vpop.f32.mrf.mxu0
      %v1429 = vpop.f32.mrf.mxu0
      %v1430 = vadd.f32 0.0, %v1429
      %v1431 = vpop.f32.mrf.mxu0
      %1432 = vmatprep.mubr.bf16.mxu0 0
      %1433 = vmatmul.mubr.bf16.gmra.mxu0 %v1367
      %v1434 = vpop.f32.mrf.mxu0
      %v1435 = vadd.f32 0.0, %v1434
      %v1436 = vpop.f32.mrf.mxu0
      %v1437 = vpop.f32.mrf.mxu0
      %v1438 = vadd.f32 0.0, %v1437
      %v1439 = vpop.f32.mrf.mxu0
      %1440 = vmatprep.mubr.bf16.mxu0 0
      %1441 = vmatmul.mubr.bf16.gmra.mxu0 %v1370
      %v1442 = vpop.f32.mrf.mxu0
      %v1443 = vadd.f32 0.0, %v1442
      %v1444 = vpop.f32.mrf.mxu0
      %v1445 = vpop.f32.mrf.mxu0
      %v1446 = vadd.f32 0.0, %v1445
      %v1447 = vpop.f32.mrf.mxu0
      %1448 = vmatprep.mubr.bf16.mxu0 0
      %1449 = vmatmul.mubr.bf16.gmra.mxu0 %v1373
      %v1450 = vpop.f32.mrf.mxu0
      %v1451 = vadd.f32 0.0, %v1450
      %v1452 = vpop.f32.mrf.mxu0
      %v1453 = vpop.f32.mrf.mxu0
      %v1454 = vadd.f32 0.0, %v1453
      %v1455 = vpop.f32.mrf.mxu0
      %1456 = vmatprep.mubr.bf16.mxu0 0
      %1457 = vmatmul.mubr.bf16.gmra.mxu0 %v1376
      %v1458 = vpop.f32.mrf.mxu0
      %v1459 = vadd.f32 0.0, %v1458
      %v1460 = vpop.f32.mrf.mxu0
      %v1461 = vpop.f32.mrf.mxu0
      %v1462 = vadd.f32 0.0, %v1461
      %v1463 = vpop.f32.mrf.mxu0
      %1464 = vmatprep.mubr.bf16.mxu0 0
      %1465 = vmatmul.mubr.bf16.gmra.mxu0 %v1379
      %v1466 = vpop.f32.mrf.mxu0
      %v1467 = vadd.f32 0.0, %v1466
      %v1468 = vpop.f32.mrf.mxu0
      %v1469 = vpop.f32.mrf.mxu0
      %v1470 = vadd.f32 0.0, %v1469
      %v1471 = vpop.f32.mrf.mxu0
      %1472 = vmatprep.mubr.bf16.mxu0 0
      %1473 = vmatmul.mubr.bf16.gmra.mxu0 %v1382
      %v1474 = vpop.f32.mrf.mxu0
      %v1475 = vadd.f32 0.0, %v1474
      %v1476 = vpop.f32.mrf.mxu0
      %v1477 = vpop.f32.mrf.mxu0
      %v1478 = vadd.f32 0.0, %v1477
      %v1479 = vpop.f32.mrf.mxu0
      %1480 = vdwg.mxu0
      %v1481 = vadd.f32 %v1207, %v1419
      %v1482 = vadd.f32 %v1208, %v1422
      %v1483 = vadd.f32 %v1209, %v1427
      %v1484 = vadd.f32 %v1210, %v1430
      %v1485 = vadd.f32 %v1211, %v1435
      %v1486 = vadd.f32 %v1212, %v1438
      %v1487 = vadd.f32 %v1213, %v1443
      %v1488 = vadd.f32 %v1214, %v1446
      %v1489 = vadd.f32 %v1215, %v1451
      %v1490 = vadd.f32 %v1216, %v1454
      %v1491 = vadd.f32 %v1217, %v1459
      %v1492 = vadd.f32 %v1218, %v1462
      %v1493 = vadd.f32 %v1219, %v1467
      %v1494 = vadd.f32 %v1220, %v1470
      %v1495 = vadd.f32 %v1221, %v1475
      %v1496 = vadd.f32 %v1222, %v1478
      %1497 = vst [vmem:[#allocation2] sm:$0xff] %v1481
      %1498 = vst [vmem:[#allocation2 + $0x8] sm:$0xff] %v1482
      %1499 = vst [vmem:[#allocation2 + $0x10] sm:$0xff] %v1483
      %1500 = vst [vmem:[#allocation2 + $0x18] sm:$0xff] %v1484
      %1501 = vst [vmem:[#allocation2 + $0x20] sm:$0xff] %v1485
      %1502 = vst [vmem:[#allocation2 + $0x28] sm:$0xff] %v1486
      %1503 = vst [vmem:[#allocation2 + $0x30] sm:$0xff] %v1487
      %1504 = vst [vmem:[#allocation2 + $0x38] sm:$0xff] %v1488
      %1505 = vst [vmem:[#allocation2 + $0x40] sm:$0xff] %v1489
      %1506 = vst [vmem:[#allocation2 + $0x48] sm:$0xff] %v1490
      %1507 = vst [vmem:[#allocation2 + $0x50] sm:$0xff] %v1491
      %1508 = vst [vmem:[#allocation2 + $0x58] sm:$0xff] %v1492
      %1509 = vst [vmem:[#allocation2 + $0x60] sm:$0xff] %v1493
      %1510 = vst [vmem:[#allocation2 + $0x68] sm:$0xff] %v1494
      %1511 = vst [vmem:[#allocation2 + $0x70] sm:$0xff] %v1495
      %1512 = vst [vmem:[#allocation2 + $0x78] sm:$0xff] %v1496
      %v1513 = vld [vmem:[#allocation2] sm:$0xff]
      %v1514 = vld [vmem:[#allocation2 + $0x8] sm:$0xff]
      %v1515 = vld [vmem:[#allocation2 + $0x10] sm:$0xff]
      %v1516 = vld [vmem:[#allocation2 + $0x18] sm:$0xff]
      %v1517 = vld [vmem:[#allocation2 + $0x20] sm:$0xff]
      %v1518 = vld [vmem:[#allocation2 + $0x28] sm:$0xff]
      %v1519 = vld [vmem:[#allocation2 + $0x30] sm:$0xff]
      %v1520 = vld [vmem:[#allocation2 + $0x38] sm:$0xff]
      %v1521 = vld [vmem:[#allocation2 + $0x40] sm:$0xff]
      %v1522 = vld [vmem:[#allocation2 + $0x48] sm:$0xff]
      %v1523 = vld [vmem:[#allocation2 + $0x50] sm:$0xff]
      %v1524 = vld [vmem:[#allocation2 + $0x58] sm:$0xff]
      %v1525 = vld [vmem:[#allocation2 + $0x60] sm:$0xff]
      %v1526 = vld [vmem:[#allocation2 + $0x68] sm:$0xff]
      %v1527 = vld [vmem:[#allocation2 + $0x70] sm:$0xff]
      %v1528 = vld [vmem:[#allocation2 + $0x78] sm:$0xff]
      %v1529 = vld [vmem:[%s197 + $0x8] sm:$0xe]
      %v1530 = vld [vmem:[%s197 + $0xc] sm:$0xf]
      %v1531 = vld [vmem:[%s197 + $0x10] sm:$0xf]
      %v1532 = vld [vmem:[%s197 + $0x14] sm:$0xf]
      %v1533 = vld [vmem:[%s197 + $0x18] sm:$0xf]
      %v1534 = vld [vmem:[%s197 + $0x1c] sm:$0xf]
      %v1535 = vld [vmem:[%s197 + $0x20] sm:$0xf]
      %v1536 = vld [vmem:[%s197 + $0x24] sm:$0xf]
      %v1537 = vld [vmem:[%s197 + $0x28] sm:$0xf]
      %v1538 = vld [vmem:[%s197 + $0x2c] sm:$0xf]
      %v1539 = vld [vmem:[%s197 + $0x30] sm:$0xf]
      %v1540 = vld [vmem:[%s197 + $0x34] sm:$0xf]
      %v1541 = vld [vmem:[%s197 + $0x38] sm:$0xf]
      %v1542 = vld [vmem:[%s197 + $0x3c] sm:$0xf]
      %v1543 = vld [vmem:[%s197 + $0x40] sm:$0xf]
      %v1544 = vld [vmem:[%s197 + $0x44] sm:$0xf]
      %v1545 = vld [vmem:[%s197 + $0x48] sm:$0x1]
      %s1546 = scalar_lea.vmem %s1, 40
      %v1547 = vld [vmem:[%s1546] sm:$0xf]
      %v1548 = vld [vmem:[%s1546 + $0x4] sm:$0xf]
      %v1566 = vunpack.c.l.b16 %v1529
      %v1567 = vunpack.c.l.b16 %v1530
      %v1568 = vunpack.c.l.b16 %v1531
      %v1569 = vunpack.c.l.b16 %v1532
      %v1570 = vunpack.c.l.b16 %v1533
      %v1571 = vunpack.c.l.b16 %v1534
      %v1572 = vunpack.c.l.b16 %v1535
      %v1573 = vunpack.c.l.b16 %v1536
      %v1574 = vunpack.c.l.b16 %v1537
      %v1575 = vunpack.c.l.b16 %v1538
      %v1576 = vunpack.c.l.b16 %v1539
      %v1577 = vunpack.c.l.b16 %v1540
      %v1578 = vunpack.c.l.b16 %v1541
      %v1579 = vunpack.c.l.b16 %v1542
      %v1580 = vunpack.c.l.b16 %v1543
      %v1581 = vunpack.c.l.b16 %v1544
      %v1582 = vunpack.c.l.b16 %v1545
      %v1583 = vpack.c.b16 %v1567, %v1566
      %v1584 = vpack.c.b16 %v1569, %v1568
      %v1585 = vpack.c.b16 %v1571, %v1570
      %v1586 = vpack.c.b16 %v1573, %v1572
      %v1587 = vpack.c.b16 %v1575, %v1574
      %v1588 = vpack.c.b16 %v1577, %v1576
      %v1589 = vpack.c.b16 %v1579, %v1578
      %v1590 = vpack.c.b16 %v1581, %v1580
      %v1591 = vpack.c.b16 %v1582, %v1582
      %v1592 = vrot.slane %v1583, 1
      %v1593 = vrot.slane %v1584, 1
      %v1594 = vsel %vm796, %v1592, %v1593
      %v1595 = vrot.slane %v1585, 1
      %v1596 = vsel %vm796, %v1593, %v1595
      %v1597 = vrot.slane %v1586, 1
      %v1598 = vsel %vm796, %v1595, %v1597
      %v1599 = vrot.slane %v1587, 1
      %v1600 = vsel %vm796, %v1597, %v1599
      %v1601 = vrot.slane %v1588, 1
      %v1602 = vsel %vm796, %v1599, %v1601
      %v1603 = vrot.slane %v1589, 1
      %v1604 = vsel %vm796, %v1601, %v1603
      %v1605 = vrot.slane %v1590, 1
      %v1606 = vsel %vm796, %v1603, %v1605
      %v1607 = vrot.slane %v1591, 1
      %v1608 = vsel %vm796, %v1605, %v1607
      %v1611 = vunpack.c.l.b16 %v1547
      %v1612 = vunpack.c.l.b16 %v1548
      %v1613 = vpack.c.b16 %v1612, %v1611
      %v1616 = vsel %vm272, %v1594, 0
      %v1619 = vsel %vm272, %v1596, 0
      %v1622 = vsel %vm272, %v1598, 0
      %v1625 = vsel %vm272, %v1600, 0
      %v1628 = vsel %vm272, %v1602, 0
      %v1631 = vsel %vm272, %v1604, 0
      %v1634 = vsel %vm272, %v1606, 0
      %v1637 = vsel %vm272, %v1608, 0
      %1639 = vmatprep.subr.bf16.mxu0 0
      %1640 = vmatpush1.bf16.msra.mxu0 0
      %1641 = vmatprep.subr.bf16.mxu0 0
      %1642 = vmatpush1.bf16.msra.mxu0 0
      %1643 = vmatprep.subr.bf16.mxu0 0
      %1644 = vmatpush1.bf16.msra.mxu0 0
      %1645 = vmatprep.subr.bf16.mxu0 0
      %1646 = vmatpush1.bf16.msra.mxu0 0
      %1647 = vmatprep.subr.bf16.mxu0 0
      %1648 = vmatpush1.bf16.msra.mxu0 0
      %1649 = vmatprep.subr.bf16.mxu0 0
      %1650 = vmatpush1.bf16.msra.mxu0 0
      %1651 = vmatprep.subr.bf16.mxu0 0
      %1652 = vmatpush1.bf16.msra.mxu0 0
      %1653 = vmatprep.subr.bf16.mxu0 0
      %1654 = vmatpush1.bf16.msra.mxu0 %v1613
      %1655 = vmatprep.subr.bf16.mxu0 0
      %1656 = vmatpush2.bf16.msra.mxu0 0
      %1657 = vmatprep.subr.bf16.mxu0 0
      %1658 = vmatpush2.bf16.msra.mxu0 0
      %1659 = vmatprep.subr.bf16.mxu0 0
      %1660 = vmatpush2.bf16.msra.mxu0 0
      %1661 = vmatprep.subr.bf16.mxu0 0
      %1662 = vmatpush2.bf16.msra.mxu0 0
      %1663 = vmatprep.subr.bf16.mxu0 0
      %1664 = vmatpush2.bf16.msra.mxu0 0
      %1665 = vmatprep.subr.bf16.mxu0 0
      %1666 = vmatpush2.bf16.msra.mxu0 0
      %1667 = vmatprep.subr.bf16.mxu0 0
      %1668 = vmatpush2.bf16.msra.mxu0 0
      %1669 = vmatprep.subr.bf16.mxu0 0
      %1670 = vmatpush2.bf16.msra.mxu0 0
      %1671 = vmatprep.mubr.bf16.mxu0 0
      %1672 = vmatmul.mubr.bf16.gmra.mxu0 %v1616
      %v1673 = vpop.f32.mrf.mxu0
      %v1674 = vadd.f32 0.0, %v1673
      %v1675 = vpop.f32.mrf.mxu0
      %v1676 = vpop.f32.mrf.mxu0
      %v1677 = vadd.f32 0.0, %v1676
      %v1678 = vpop.f32.mrf.mxu0
      %1679 = vmatprep.mubr.bf16.mxu0 0
      %1680 = vmatmul.mubr.bf16.gmra.mxu0 %v1619
      %v1681 = vpop.f32.mrf.mxu0
      %v1682 = vadd.f32 0.0, %v1681
      %v1683 = vpop.f32.mrf.mxu0
      %v1684 = vpop.f32.mrf.mxu0
      %v1685 = vadd.f32 0.0, %v1684
      %v1686 = vpop.f32.mrf.mxu0
      %1687 = vmatprep.mubr.bf16.mxu0 0
      %1688 = vmatmul.mubr.bf16.gmra.mxu0 %v1622
      %v1689 = vpop.f32.mrf.mxu0
      %v1690 = vadd.f32 0.0, %v1689
      %v1691 = vpop.f32.mrf.mxu0
      %v1692 = vpop.f32.mrf.mxu0
      %v1693 = vadd.f32 0.0, %v1692
      %v1694 = vpop.f32.mrf.mxu0
      %1695 = vmatprep.mubr.bf16.mxu0 0
      %1696 = vmatmul.mubr.bf16.gmra.mxu0 %v1625
      %v1697 = vpop.f32.mrf.mxu0
      %v1698 = vadd.f32 0.0, %v1697
      %v1699 = vpop.f32.mrf.mxu0
      %v1700 = vpop.f32.mrf.mxu0
      %v1701 = vadd.f32 0.0, %v1700
      %v1702 = vpop.f32.mrf.mxu0
      %1703 = vmatprep.mubr.bf16.mxu0 0
      %1704 = vmatmul.mubr.bf16.gmra.mxu0 %v1628
      %v1705 = vpop.f32.mrf.mxu0
      %v1706 = vadd.f32 0.0, %v1705
      %v1707 = vpop.f32.mrf.mxu0
      %v1708 = vpop.f32.mrf.mxu0
      %v1709 = vadd.f32 0.0, %v1708
      %v1710 = vpop.f32.mrf.mxu0
      %1711 = vmatprep.mubr.bf16.mxu0 0
      %1712 = vmatmul.mubr.bf16.gmra.mxu0 %v1631
      %v1713 = vpop.f32.mrf.mxu0
      %v1714 = vadd.f32 0.0, %v1713
      %v1715 = vpop.f32.mrf.mxu0
      %v1716 = vpop.f32.mrf.mxu0
      %v1717 = vadd.f32 0.0, %v1716
      %v1718 = vpop.f32.mrf.mxu0
      %1719 = vmatprep.mubr.bf16.mxu0 0
      %1720 = vmatmul.mubr.bf16.gmra.mxu0 %v1634
      %v1721 = vpop.f32.mrf.mxu0
      %v1722 = vadd.f32 0.0, %v1721
      %v1723 = vpop.f32.mrf.mxu0
      %v1724 = vpop.f32.mrf.mxu0
      %v1725 = vadd.f32 0.0, %v1724
      %v1726 = vpop.f32.mrf.mxu0
      %1727 = vmatprep.mubr.bf16.mxu0 0
      %1728 = vmatmul.mubr.bf16.gmra.mxu0 %v1637
      %v1729 = vpop.f32.mrf.mxu0
      %v1730 = vadd.f32 0.0, %v1729
      %v1731 = vpop.f32.mrf.mxu0
      %v1732 = vpop.f32.mrf.mxu0
      %v1733 = vadd.f32 0.0, %v1732
      %v1734 = vpop.f32.mrf.mxu0
      %1735 = vdwg.mxu0
      %v1736 = vadd.f32 %v1513, %v1674
      %v1737 = vadd.f32 %v1514, %v1677
      %v1738 = vadd.f32 %v1515, %v1682
      %v1739 = vadd.f32 %v1516, %v1685
      %v1740 = vadd.f32 %v1517, %v1690
      %v1741 = vadd.f32 %v1518, %v1693
      %v1742 = vadd.f32 %v1519, %v1698
      %v1743 = vadd.f32 %v1520, %v1701
      %v1744 = vadd.f32 %v1521, %v1706
      %v1745 = vadd.f32 %v1522, %v1709
      %v1746 = vadd.f32 %v1523, %v1714
      %v1747 = vadd.f32 %v1524, %v1717
      %v1748 = vadd.f32 %v1525, %v1722
      %v1749 = vadd.f32 %v1526, %v1725
      %v1750 = vadd.f32 %v1527, %v1730
      %v1751 = vadd.f32 %v1528, %v1733
      %1752 = vst [vmem:[#allocation2] sm:$0xff] %v1736
      %1753 = vst [vmem:[#allocation2 + $0x8] sm:$0xff] %v1737
      %1754 = vst [vmem:[#allocation2 + $0x10] sm:$0xff] %v1738
      %1755 = vst [vmem:[#allocation2 + $0x18] sm:$0xff] %v1739
      %1756 = vst [vmem:[#allocation2 + $0x20] sm:$0xff] %v1740
      %1757 = vst [vmem:[#allocation2 + $0x28] sm:$0xff] %v1741
      %1758 = vst [vmem:[#allocation2 + $0x30] sm:$0xff] %v1742
      %1759 = vst [vmem:[#allocation2 + $0x38] sm:$0xff] %v1743
      %1760 = vst [vmem:[#allocation2 + $0x40] sm:$0xff] %v1744
      %1761 = vst [vmem:[#allocation2 + $0x48] sm:$0xff] %v1745
      %1762 = vst [vmem:[#allocation2 + $0x50] sm:$0xff] %v1746
      %1763 = vst [vmem:[#allocation2 + $0x58] sm:$0xff] %v1747
      %1764 = vst [vmem:[#allocation2 + $0x60] sm:$0xff] %v1748
      %1765 = vst [vmem:[#allocation2 + $0x68] sm:$0xff] %v1749
      %1766 = vst [vmem:[#allocation2 + $0x70] sm:$0xff] %v1750
      %1767 = vst [vmem:[#allocation2 + $0x78] sm:$0xff] %v1751
      %v1768 = vld [vmem:[#allocation2] sm:$0xff]
      %v1769 = vld [vmem:[#allocation2 + $0x8] sm:$0xff]
      %v1770 = vld [vmem:[#allocation2 + $0x10] sm:$0xff]
      %v1771 = vld [vmem:[#allocation2 + $0x18] sm:$0xff]
      %v1772 = vld [vmem:[#allocation2 + $0x20] sm:$0xff]
      %v1773 = vld [vmem:[#allocation2 + $0x28] sm:$0xff]
      %v1774 = vld [vmem:[#allocation2 + $0x30] sm:$0xff]
      %v1775 = vld [vmem:[#allocation2 + $0x38] sm:$0xff]
      %v1776 = vld [vmem:[#allocation2 + $0x40] sm:$0xff]
      %v1777 = vld [vmem:[#allocation2 + $0x48] sm:$0xff]
      %v1778 = vld [vmem:[#allocation2 + $0x50] sm:$0xff]
      %v1779 = vld [vmem:[#allocation2 + $0x58] sm:$0xff]
      %v1780 = vld [vmem:[#allocation2 + $0x60] sm:$0xff]
      %v1781 = vld [vmem:[#allocation2 + $0x68] sm:$0xff]
      %v1782 = vld [vmem:[#allocation2 + $0x70] sm:$0xff]
      %v1783 = vld [vmem:[#allocation2 + $0x78] sm:$0xff]
      %v1784 = vld [vmem:[%s197 + $0x10] sm:$0xf]
      %v1785 = vld [vmem:[%s197 + $0x14] sm:$0xf]
      %v1786 = vld [vmem:[%s197 + $0x18] sm:$0xf]
      %v1787 = vld [vmem:[%s197 + $0x1c] sm:$0xf]
      %v1788 = vld [vmem:[%s197 + $0x20] sm:$0xf]
      %v1789 = vld [vmem:[%s197 + $0x24] sm:$0xf]
      %v1790 = vld [vmem:[%s197 + $0x28] sm:$0xf]
      %v1791 = vld [vmem:[%s197 + $0x2c] sm:$0xf]
      %v1792 = vld [vmem:[%s197 + $0x30] sm:$0xf]
      %v1793 = vld [vmem:[%s197 + $0x34] sm:$0xf]
      %v1794 = vld [vmem:[%s197 + $0x38] sm:$0xf]
      %v1795 = vld [vmem:[%s197 + $0x3c] sm:$0xf]
      %v1796 = vld [vmem:[%s197 + $0x40] sm:$0xf]
      %v1797 = vld [vmem:[%s197 + $0x44] sm:$0xf]
      %v1798 = vld [vmem:[%s197 + $0x48] sm:$0xf]
      %v1799 = vld [vmem:[%s197 + $0x4c] sm:$0xf]
      %s1800 = scalar_lea.vmem %s1, 48
      %v1801 = vld [vmem:[%s1800] sm:$0xf]
      %v1802 = vld [vmem:[%s1800 + $0x4] sm:$0xf]
      %v1819 = vunpack.c.l.b16 %v1784
      %v1820 = vunpack.c.l.b16 %v1785
      %v1821 = vunpack.c.l.b16 %v1786
      %v1822 = vunpack.c.l.b16 %v1787
      %v1823 = vunpack.c.l.b16 %v1788
      %v1824 = vunpack.c.l.b16 %v1789
      %v1825 = vunpack.c.l.b16 %v1790
      %v1826 = vunpack.c.l.b16 %v1791
      %v1827 = vunpack.c.l.b16 %v1792
      %v1828 = vunpack.c.l.b16 %v1793
      %v1829 = vunpack.c.l.b16 %v1794
      %v1830 = vunpack.c.l.b16 %v1795
      %v1831 = vunpack.c.l.b16 %v1796
      %v1832 = vunpack.c.l.b16 %v1797
      %v1833 = vunpack.c.l.b16 %v1798
      %v1834 = vunpack.c.l.b16 %v1799
      %v1835 = vpack.c.b16 %v1820, %v1819
      %v1836 = vpack.c.b16 %v1822, %v1821
      %v1837 = vpack.c.b16 %v1824, %v1823
      %v1838 = vpack.c.b16 %v1826, %v1825
      %v1839 = vpack.c.b16 %v1828, %v1827
      %v1840 = vpack.c.b16 %v1830, %v1829
      %v1841 = vpack.c.b16 %v1832, %v1831
      %v1842 = vpack.c.b16 %v1834, %v1833
      %v1845 = vunpack.c.l.b16 %v1801
      %v1846 = vunpack.c.l.b16 %v1802
      %v1847 = vpack.c.b16 %v1846, %v1845
      %v1850 = vsel %vm272, %v1835, 0
      %v1853 = vsel %vm272, %v1836, 0
      %v1856 = vsel %vm272, %v1837, 0
      %v1859 = vsel %vm272, %v1838, 0
      %v1862 = vsel %vm272, %v1839, 0
      %v1865 = vsel %vm272, %v1840, 0
      %v1868 = vsel %vm272, %v1841, 0
      %v1871 = vsel %vm272, %v1842, 0
      %1873 = vmatprep.subr.bf16.mxu0 0
      %1874 = vmatpush1.bf16.msra.mxu0 0
      %1875 = vmatprep.subr.bf16.mxu0 0
      %1876 = vmatpush1.bf16.msra.mxu0 0
      %1877 = vmatprep.subr.bf16.mxu0 0
      %1878 = vmatpush1.bf16.msra.mxu0 0
      %1879 = vmatprep.subr.bf16.mxu0 0
      %1880 = vmatpush1.bf16.msra.mxu0 0
      %1881 = vmatprep.subr.bf16.mxu0 0
      %1882 = vmatpush1.bf16.msra.mxu0 0
      %1883 = vmatprep.subr.bf16.mxu0 0
      %1884 = vmatpush1.bf16.msra.mxu0 0
      %1885 = vmatprep.subr.bf16.mxu0 0
      %1886 = vmatpush1.bf16.msra.mxu0 0
      %1887 = vmatprep.subr.bf16.mxu0 0
      %1888 = vmatpush1.bf16.msra.mxu0 %v1847
      %1889 = vmatprep.subr.bf16.mxu0 0
      %1890 = vmatpush2.bf16.msra.mxu0 0
      %1891 = vmatprep.subr.bf16.mxu0 0
      %1892 = vmatpush2.bf16.msra.mxu0 0
      %1893 = vmatprep.subr.bf16.mxu0 0
      %1894 = vmatpush2.bf16.msra.mxu0 0
      %1895 = vmatprep.subr.bf16.mxu0 0
      %1896 = vmatpush2.bf16.msra.mxu0 0
      %1897 = vmatprep.subr.bf16.mxu0 0
      %1898 = vmatpush2.bf16.msra.mxu0 0
      %1899 = vmatprep.subr.bf16.mxu0 0
      %1900 = vmatpush2.bf16.msra.mxu0 0
      %1901 = vmatprep.subr.bf16.mxu0 0
      %1902 = vmatpush2.bf16.msra.mxu0 0
      %1903 = vmatprep.subr.bf16.mxu0 0
      %1904 = vmatpush2.bf16.msra.mxu0 0
      %1905 = vmatprep.mubr.bf16.mxu0 0
      %1906 = vmatmul.mubr.bf16.gmra.mxu0 %v1850
      %v1907 = vpop.f32.mrf.mxu0
      %v1908 = vadd.f32 0.0, %v1907
      %v1909 = vpop.f32.mrf.mxu0
      %v1910 = vpop.f32.mrf.mxu0
      %v1911 = vadd.f32 0.0, %v1910
      %v1912 = vpop.f32.mrf.mxu0
      %1913 = vmatprep.mubr.bf16.mxu0 0
      %1914 = vmatmul.mubr.bf16.gmra.mxu0 %v1853
      %v1915 = vpop.f32.mrf.mxu0
      %v1916 = vadd.f32 0.0, %v1915
      %v1917 = vpop.f32.mrf.mxu0
      %v1918 = vpop.f32.mrf.mxu0
      %v1919 = vadd.f32 0.0, %v1918
      %v1920 = vpop.f32.mrf.mxu0
      %1921 = vmatprep.mubr.bf16.mxu0 0
      %1922 = vmatmul.mubr.bf16.gmra.mxu0 %v1856
      %v1923 = vpop.f32.mrf.mxu0
      %v1924 = vadd.f32 0.0, %v1923
      %v1925 = vpop.f32.mrf.mxu0
      %v1926 = vpop.f32.mrf.mxu0
      %v1927 = vadd.f32 0.0, %v1926
      %v1928 = vpop.f32.mrf.mxu0
      %1929 = vmatprep.mubr.bf16.mxu0 0
      %1930 = vmatmul.mubr.bf16.gmra.mxu0 %v1859
      %v1931 = vpop.f32.mrf.mxu0
      %v1932 = vadd.f32 0.0, %v1931
      %v1933 = vpop.f32.mrf.mxu0
      %v1934 = vpop.f32.mrf.mxu0
      %v1935 = vadd.f32 0.0, %v1934
      %v1936 = vpop.f32.mrf.mxu0
      %1937 = vmatprep.mubr.bf16.mxu0 0
      %1938 = vmatmul.mubr.bf16.gmra.mxu0 %v1862
      %v1939 = vpop.f32.mrf.mxu0
      %v1940 = vadd.f32 0.0, %v1939
      %v1941 = vpop.f32.mrf.mxu0
      %v1942 = vpop.f32.mrf.mxu0
      %v1943 = vadd.f32 0.0, %v1942
      %v1944 = vpop.f32.mrf.mxu0
      %1945 = vmatprep.mubr.bf16.mxu0 0
      %1946 = vmatmul.mubr.bf16.gmra.mxu0 %v1865
      %v1947 = vpop.f32.mrf.mxu0
      %v1948 = vadd.f32 0.0, %v1947
      %v1949 = vpop.f32.mrf.mxu0
      %v1950 = vpop.f32.mrf.mxu0
      %v1951 = vadd.f32 0.0, %v1950
      %v1952 = vpop.f32.mrf.mxu0
      %1953 = vmatprep.mubr.bf16.mxu0 0
      %1954 = vmatmul.mubr.bf16.gmra.mxu0 %v1868
      %v1955 = vpop.f32.mrf.mxu0
      %v1956 = vadd.f32 0.0, %v1955
      %v1957 = vpop.f32.mrf.mxu0
      %v1958 = vpop.f32.mrf.mxu0
      %v1959 = vadd.f32 0.0, %v1958
      %v1960 = vpop.f32.mrf.mxu0
      %1961 = vmatprep.mubr.bf16.mxu0 0
      %1962 = vmatmul.mubr.bf16.gmra.mxu0 %v1871
      %v1963 = vpop.f32.mrf.mxu0
      %v1964 = vadd.f32 0.0, %v1963
      %v1965 = vpop.f32.mrf.mxu0
      %v1966 = vpop.f32.mrf.mxu0
      %v1967 = vadd.f32 0.0, %v1966
      %v1968 = vpop.f32.mrf.mxu0
      %1969 = vdwg.mxu0
      %v1970 = vadd.f32 %v1768, %v1908
      %v1971 = vadd.f32 %v1769, %v1911
      %v1972 = vadd.f32 %v1770, %v1916
      %v1973 = vadd.f32 %v1771, %v1919
      %v1974 = vadd.f32 %v1772, %v1924
      %v1975 = vadd.f32 %v1773, %v1927
      %v1976 = vadd.f32 %v1774, %v1932
      %v1977 = vadd.f32 %v1775, %v1935
      %v1978 = vadd.f32 %v1776, %v1940
      %v1979 = vadd.f32 %v1777, %v1943
      %v1980 = vadd.f32 %v1778, %v1948
      %v1981 = vadd.f32 %v1779, %v1951
      %v1982 = vadd.f32 %v1780, %v1956
      %v1983 = vadd.f32 %v1781, %v1959
      %v1984 = vadd.f32 %v1782, %v1964
      %v1985 = vadd.f32 %v1783, %v1967
      %1986 = vst [vmem:[#allocation2] sm:$0xff] %v1970
      %1987 = vst [vmem:[#allocation2 + $0x8] sm:$0xff] %v1971
      %1988 = vst [vmem:[#allocation2 + $0x10] sm:$0xff] %v1972
      %1989 = vst [vmem:[#allocation2 + $0x18] sm:$0xff] %v1973
      %1990 = vst [vmem:[#allocation2 + $0x20] sm:$0xff] %v1974
      %1991 = vst [vmem:[#allocation2 + $0x28] sm:$0xff] %v1975
      %1992 = vst [vmem:[#allocation2 + $0x30] sm:$0xff] %v1976
      %1993 = vst [vmem:[#allocation2 + $0x38] sm:$0xff] %v1977
      %1994 = vst [vmem:[#allocation2 + $0x40] sm:$0xff] %v1978
      %1995 = vst [vmem:[#allocation2 + $0x48] sm:$0xff] %v1979
      %1996 = vst [vmem:[#allocation2 + $0x50] sm:$0xff] %v1980
      %1997 = vst [vmem:[#allocation2 + $0x58] sm:$0xff] %v1981
      %1998 = vst [vmem:[#allocation2 + $0x60] sm:$0xff] %v1982
      %1999 = vst [vmem:[#allocation2 + $0x68] sm:$0xff] %v1983
      %2000 = vst [vmem:[#allocation2 + $0x70] sm:$0xff] %v1984
      %2001 = vst [vmem:[#allocation2 + $0x78] sm:$0xff] %v1985
      %v2002 = vld [vmem:[#allocation2] sm:$0xff]
      %v2003 = vld [vmem:[#allocation2 + $0x8] sm:$0xff]
      %v2004 = vld [vmem:[#allocation2 + $0x10] sm:$0xff]
      %v2005 = vld [vmem:[#allocation2 + $0x18] sm:$0xff]
      %v2006 = vld [vmem:[#allocation2 + $0x20] sm:$0xff]
      %v2007 = vld [vmem:[#allocation2 + $0x28] sm:$0xff]
      %v2008 = vld [vmem:[#allocation2 + $0x30] sm:$0xff]
      %v2009 = vld [vmem:[#allocation2 + $0x38] sm:$0xff]
      %v2010 = vld [vmem:[#allocation2 + $0x40] sm:$0xff]
      %v2011 = vld [vmem:[#allocation2 + $0x48] sm:$0xff]
      %v2012 = vld [vmem:[#allocation2 + $0x50] sm:$0xff]
      %v2013 = vld [vmem:[#allocation2 + $0x58] sm:$0xff]
      %v2014 = vld [vmem:[#allocation2 + $0x60] sm:$0xff]
      %v2015 = vld [vmem:[#allocation2 + $0x68] sm:$0xff]
      %v2016 = vld [vmem:[#allocation2 + $0x70] sm:$0xff]
      %v2017 = vld [vmem:[#allocation2 + $0x78] sm:$0xff]
      %v2018 = vld [vmem:[%s197 + $0x10] sm:$0xf]
      %v2019 = vld [vmem:[%s197 + $0x14] sm:$0xf]
      %v2020 = vld [vmem:[%s197 + $0x18] sm:$0xf]
      %v2021 = vld [vmem:[%s197 + $0x1c] sm:$0xf]
      %v2022 = vld [vmem:[%s197 + $0x20] sm:$0xf]
      %v2023 = vld [vmem:[%s197 + $0x24] sm:$0xf]
      %v2024 = vld [vmem:[%s197 + $0x28] sm:$0xf]
      %v2025 = vld [vmem:[%s197 + $0x2c] sm:$0xf]
      %v2026 = vld [vmem:[%s197 + $0x30] sm:$0xf]
      %v2027 = vld [vmem:[%s197 + $0x34] sm:$0xf]
      %v2028 = vld [vmem:[%s197 + $0x38] sm:$0xf]
      %v2029 = vld [vmem:[%s197 + $0x3c] sm:$0xf]
      %v2030 = vld [vmem:[%s197 + $0x40] sm:$0xf]
      %v2031 = vld [vmem:[%s197 + $0x44] sm:$0xf]
      %v2032 = vld [vmem:[%s197 + $0x48] sm:$0xf]
      %v2033 = vld [vmem:[%s197 + $0x4c] sm:$0xf]
      %v2034 = vld [vmem:[%s197 + $0x50] sm:$0x1]
      %s2035 = scalar_lea.vmem %s1, 56
      %v2036 = vld [vmem:[%s2035] sm:$0xf]
      %v2037 = vld [vmem:[%s2035 + $0x4] sm:$0xf]
      %v2055 = vunpack.c.l.b16 %v2018
      %v2056 = vunpack.c.l.b16 %v2019
      %v2057 = vunpack.c.l.b16 %v2020
      %v2058 = vunpack.c.l.b16 %v2021
      %v2059 = vunpack.c.l.b16 %v2022
      %v2060 = vunpack.c.l.b16 %v2023
      %v2061 = vunpack.c.l.b16 %v2024
      %v2062 = vunpack.c.l.b16 %v2025
      %v2063 = vunpack.c.l.b16 %v2026
      %v2064 = vunpack.c.l.b16 %v2027
      %v2065 = vunpack.c.l.b16 %v2028
      %v2066 = vunpack.c.l.b16 %v2029
      %v2067 = vunpack.c.l.b16 %v2030
      %v2068 = vunpack.c.l.b16 %v2031
      %v2069 = vunpack.c.l.b16 %v2032
      %v2070 = vunpack.c.l.b16 %v2033
      %v2071 = vunpack.c.l.b16 %v2034
      %v2072 = vpack.c.b16 %v2056, %v2055
      %v2073 = vpack.c.b16 %v2058, %v2057
      %v2074 = vpack.c.b16 %v2060, %v2059
      %v2075 = vpack.c.b16 %v2062, %v2061
      %v2076 = vpack.c.b16 %v2064, %v2063
      %v2077 = vpack.c.b16 %v2066, %v2065
      %v2078 = vpack.c.b16 %v2068, %v2067
      %v2079 = vpack.c.b16 %v2070, %v2069
      %v2080 = vpack.c.b16 %v2071, %v2071
      %v2082 = vshrl.u32 %v2072, 16
      %v2084 = vshll.u32 %v2072, 16
      %v2086 = vrot.slane %v2084, 1
      %v2087 = vor.u32 %v2082, %v2086
      %v2089 = vshll.u32 %v2073, 16
      %v2091 = vrot.slane %v2089, 1
      %v2092 = vsel %vm489, %v2087, %v2091
      %v2093 = vshrl.u32 %v2073, 16
      %v2095 = vor.u32 %v2093, %v2091
      %v2097 = vshll.u32 %v2074, 16
      %v2099 = vrot.slane %v2097, 1
      %v2100 = vsel %vm489, %v2095, %v2099
      %v2101 = vshrl.u32 %v2074, 16
      %v2103 = vor.u32 %v2101, %v2099
      %v2105 = vshll.u32 %v2075, 16
      %v2107 = vrot.slane %v2105, 1
      %v2108 = vsel %vm489, %v2103, %v2107
      %v2109 = vshrl.u32 %v2075, 16
      %v2111 = vor.u32 %v2109, %v2107
      %v2113 = vshll.u32 %v2076, 16
      %v2115 = vrot.slane %v2113, 1
      %v2116 = vsel %vm489, %v2111, %v2115
      %v2117 = vshrl.u32 %v2076, 16
      %v2119 = vor.u32 %v2117, %v2115
      %v2121 = vshll.u32 %v2077, 16
      %v2123 = vrot.slane %v2121, 1
      %v2124 = vsel %vm489, %v2119, %v2123
      %v2125 = vshrl.u32 %v2077, 16
      %v2127 = vor.u32 %v2125, %v2123
      %v2129 = vshll.u32 %v2078, 16
      %v2131 = vrot.slane %v2129, 1
      %v2132 = vsel %vm489, %v2127, %v2131
      %v2133 = vshrl.u32 %v2078, 16
      %v2135 = vor.u32 %v2133, %v2131
      %v2137 = vshll.u32 %v2079, 16
      %v2139 = vrot.slane %v2137, 1
      %v2140 = vsel %vm489, %v2135, %v2139
      %v2141 = vshrl.u32 %v2079, 16
      %v2143 = vor.u32 %v2141, %v2139
      %v2145 = vshll.u32 %v2080, 16
      %v2147 = vrot.slane %v2145, 1
      %v2148 = vsel %vm489, %v2143, %v2147
      %v2151 = vunpack.c.l.b16 %v2036
      %v2152 = vunpack.c.l.b16 %v2037
      %v2153 = vpack.c.b16 %v2152, %v2151
      %v2156 = vsel %vm272, %v2092, 0
      %v2159 = vsel %vm272, %v2100, 0
      %v2162 = vsel %vm272, %v2108, 0
      %v2165 = vsel %vm272, %v2116, 0
      %v2168 = vsel %vm272, %v2124, 0
      %v2171 = vsel %vm272, %v2132, 0
      %v2174 = vsel %vm272, %v2140, 0
      %v2177 = vsel %vm272, %v2148, 0
      %2179 = vmatprep.subr.bf16.mxu0 0
      %2180 = vmatpush1.bf16.msra.mxu0 0
      %2181 = vmatprep.subr.bf16.mxu0 0
      %2182 = vmatpush1.bf16.msra.mxu0 0
      %2183 = vmatprep.subr.bf16.mxu0 0
      %2184 = vmatpush1.bf16.msra.mxu0 0
      %2185 = vmatprep.subr.bf16.mxu0 0
      %2186 = vmatpush1.bf16.msra.mxu0 0
      %2187 = vmatprep.subr.bf16.mxu0 0
      %2188 = vmatpush1.bf16.msra.mxu0 0
      %2189 = vmatprep.subr.bf16.mxu0 0
      %2190 = vmatpush1.bf16.msra.mxu0 0
      %2191 = vmatprep.subr.bf16.mxu0 0
      %2192 = vmatpush1.bf16.msra.mxu0 0
      %2193 = vmatprep.subr.bf16.mxu0 0
      %2194 = vmatpush1.bf16.msra.mxu0 %v2153
      %2195 = vmatprep.subr.bf16.mxu0 0
      %2196 = vmatpush2.bf16.msra.mxu0 0
      %2197 = vmatprep.subr.bf16.mxu0 0
      %2198 = vmatpush2.bf16.msra.mxu0 0
      %2199 = vmatprep.subr.bf16.mxu0 0
      %2200 = vmatpush2.bf16.msra.mxu0 0
      %2201 = vmatprep.subr.bf16.mxu0 0
      %2202 = vmatpush2.bf16.msra.mxu0 0
      %2203 = vmatprep.subr.bf16.mxu0 0
      %2204 = vmatpush2.bf16.msra.mxu0 0
      %2205 = vmatprep.subr.bf16.mxu0 0
      %2206 = vmatpush2.bf16.msra.mxu0 0
      %2207 = vmatprep.subr.bf16.mxu0 0
      %2208 = vmatpush2.bf16.msra.mxu0 0
      %2209 = vmatprep.subr.bf16.mxu0 0
      %2210 = vmatpush2.bf16.msra.mxu0 0
      %2211 = vmatprep.mubr.bf16.mxu0 0
      %2212 = vmatmul.mubr.bf16.gmra.mxu0 %v2156
      %v2213 = vpop.f32.mrf.mxu0
      %v2214 = vadd.f32 0.0, %v2213
      %v2215 = vpop.f32.mrf.mxu0
      %v2216 = vpop.f32.mrf.mxu0
      %v2217 = vadd.f32 0.0, %v2216
      %v2218 = vpop.f32.mrf.mxu0
      %2219 = vmatprep.mubr.bf16.mxu0 0
      %2220 = vmatmul.mubr.bf16.gmra.mxu0 %v2159
      %v2221 = vpop.f32.mrf.mxu0
      %v2222 = vadd.f32 0.0, %v2221
      %v2223 = vpop.f32.mrf.mxu0
      %v2224 = vpop.f32.mrf.mxu0
      %v2225 = vadd.f32 0.0, %v2224
      %v2226 = vpop.f32.mrf.mxu0
      %2227 = vmatprep.mubr.bf16.mxu0 0
      %2228 = vmatmul.mubr.bf16.gmra.mxu0 %v2162
      %v2229 = vpop.f32.mrf.mxu0
      %v2230 = vadd.f32 0.0, %v2229
      %v2231 = vpop.f32.mrf.mxu0
      %v2232 = vpop.f32.mrf.mxu0
      %v2233 = vadd.f32 0.0, %v2232
      %v2234 = vpop.f32.mrf.mxu0
      %2235 = vmatprep.mubr.bf16.mxu0 0
      %2236 = vmatmul.mubr.bf16.gmra.mxu0 %v2165
      %v2237 = vpop.f32.mrf.mxu0
      %v2238 = vadd.f32 0.0, %v2237
      %v2239 = vpop.f32.mrf.mxu0
      %v2240 = vpop.f32.mrf.mxu0
      %v2241 = vadd.f32 0.0, %v2240
      %v2242 = vpop.f32.mrf.mxu0
      %2243 = vmatprep.mubr.bf16.mxu0 0
      %2244 = vmatmul.mubr.bf16.gmra.mxu0 %v2168
      %v2245 = vpop.f32.mrf.mxu0
      %v2246 = vadd.f32 0.0, %v2245
      %v2247 = vpop.f32.mrf.mxu0
      %v2248 = vpop.f32.mrf.mxu0
      %v2249 = vadd.f32 0.0, %v2248
      %v2250 = vpop.f32.mrf.mxu0
      %2251 = vmatprep.mubr.bf16.mxu0 0
      %2252 = vmatmul.mubr.bf16.gmra.mxu0 %v2171
      %v2253 = vpop.f32.mrf.mxu0
      %v2254 = vadd.f32 0.0, %v2253
      %v2255 = vpop.f32.mrf.mxu0
      %v2256 = vpop.f32.mrf.mxu0
      %v2257 = vadd.f32 0.0, %v2256
      %v2258 = vpop.f32.mrf.mxu0
      %2259 = vmatprep.mubr.bf16.mxu0 0
      %2260 = vmatmul.mubr.bf16.gmra.mxu0 %v2174
      %v2261 = vpop.f32.mrf.mxu0
      %v2262 = vadd.f32 0.0, %v2261
      %v2263 = vpop.f32.mrf.mxu0
      %v2264 = vpop.f32.mrf.mxu0
      %v2265 = vadd.f32 0.0, %v2264
      %v2266 = vpop.f32.mrf.mxu0
      %2267 = vmatprep.mubr.bf16.mxu0 0
      %2268 = vmatmul.mubr.bf16.gmra.mxu0 %v2177
      %v2269 = vpop.f32.mrf.mxu0
      %v2270 = vadd.f32 0.0, %v2269
      %v2271 = vpop.f32.mrf.mxu0
      %v2272 = vpop.f32.mrf.mxu0
      %v2273 = vadd.f32 0.0, %v2272
      %v2274 = vpop.f32.mrf.mxu0
      %2275 = vdwg.mxu0
      %v2276 = vadd.f32 %v2002, %v2214
      %v2277 = vadd.f32 %v2003, %v2217
      %v2278 = vadd.f32 %v2004, %v2222
      %v2279 = vadd.f32 %v2005, %v2225
      %v2280 = vadd.f32 %v2006, %v2230
      %v2281 = vadd.f32 %v2007, %v2233
      %v2282 = vadd.f32 %v2008, %v2238
      %v2283 = vadd.f32 %v2009, %v2241
      %v2284 = vadd.f32 %v2010, %v2246
      %v2285 = vadd.f32 %v2011, %v2249
      %v2286 = vadd.f32 %v2012, %v2254
      %v2287 = vadd.f32 %v2013, %v2257
      %v2288 = vadd.f32 %v2014, %v2262
      %v2289 = vadd.f32 %v2015, %v2265
      %v2290 = vadd.f32 %v2016, %v2270
      %v2291 = vadd.f32 %v2017, %v2273
      %2292 = vst [vmem:[#allocation2] sm:$0xff] %v2276
      %2293 = vst [vmem:[#allocation2 + $0x8] sm:$0xff] %v2277
      %2294 = vst [vmem:[#allocation2 + $0x10] sm:$0xff] %v2278
      %2295 = vst [vmem:[#allocation2 + $0x18] sm:$0xff] %v2279
      %2296 = vst [vmem:[#allocation2 + $0x20] sm:$0xff] %v2280
      %2297 = vst [vmem:[#allocation2 + $0x28] sm:$0xff] %v2281
      %2298 = vst [vmem:[#allocation2 + $0x30] sm:$0xff] %v2282
      %2299 = vst [vmem:[#allocation2 + $0x38] sm:$0xff] %v2283
      %2300 = vst [vmem:[#allocation2 + $0x40] sm:$0xff] %v2284
      %2301 = vst [vmem:[#allocation2 + $0x48] sm:$0xff] %v2285
      %2302 = vst [vmem:[#allocation2 + $0x50] sm:$0xff] %v2286
      %2303 = vst [vmem:[#allocation2 + $0x58] sm:$0xff] %v2287
      %2304 = vst [vmem:[#allocation2 + $0x60] sm:$0xff] %v2288
      %2305 = vst [vmem:[#allocation2 + $0x68] sm:$0xff] %v2289
      %2306 = vst [vmem:[#allocation2 + $0x70] sm:$0xff] %v2290
      %2307 = vst [vmem:[#allocation2 + $0x78] sm:$0xff] %v2291
      %v2308 = vld [vmem:[#allocation2] sm:$0xff]
      %v2309 = vld [vmem:[#allocation2 + $0x8] sm:$0xff]
      %v2310 = vld [vmem:[#allocation2 + $0x10] sm:$0xff]
      %v2311 = vld [vmem:[#allocation2 + $0x18] sm:$0xff]
      %v2312 = vld [vmem:[#allocation2 + $0x20] sm:$0xff]
      %v2313 = vld [vmem:[#allocation2 + $0x28] sm:$0xff]
      %v2314 = vld [vmem:[#allocation2 + $0x30] sm:$0xff]
      %v2315 = vld [vmem:[#allocation2 + $0x38] sm:$0xff]
      %v2316 = vld [vmem:[#allocation2 + $0x40] sm:$0xff]
      %v2317 = vld [vmem:[#allocation2 + $0x48] sm:$0xff]
      %v2318 = vld [vmem:[#allocation2 + $0x50] sm:$0xff]
      %v2319 = vld [vmem:[#allocation2 + $0x58] sm:$0xff]
      %v2320 = vld [vmem:[#allocation2 + $0x60] sm:$0xff]
      %v2321 = vld [vmem:[#allocation2 + $0x68] sm:$0xff]
      %v2322 = vld [vmem:[#allocation2 + $0x70] sm:$0xff]
      %v2323 = vld [vmem:[#allocation2 + $0x78] sm:$0xff]
      %v2324 = vld [vmem:[%s197 + $0x10] sm:$0xe]
      %v2325 = vld [vmem:[%s197 + $0x14] sm:$0xf]
      %v2326 = vld [vmem:[%s197 + $0x18] sm:$0xf]
      %v2327 = vld [vmem:[%s197 + $0x1c] sm:$0xf]
      %v2328 = vld [vmem:[%s197 + $0x20] sm:$0xf]
      %v2329 = vld [vmem:[%s197 + $0x24] sm:$0xf]
      %v2330 = vld [vmem:[%s197 + $0x28] sm:$0xf]
      %v2331 = vld [vmem:[%s197 + $0x2c] sm:$0xf]
      %v2332 = vld [vmem:[%s197 + $0x30] sm:$0xf]
      %v2333 = vld [vmem:[%s197 + $0x34] sm:$0xf]
      %v2334 = vld [vmem:[%s197 + $0x38] sm:$0xf]
      %v2335 = vld [vmem:[%s197 + $0x3c] sm:$0xf]
      %v2336 = vld [vmem:[%s197 + $0x40] sm:$0xf]
      %v2337 = vld [vmem:[%s197 + $0x44] sm:$0xf]
      %v2338 = vld [vmem:[%s197 + $0x48] sm:$0xf]
      %v2339 = vld [vmem:[%s197 + $0x4c] sm:$0xf]
      %v2340 = vld [vmem:[%s197 + $0x50] sm:$0x1]
      %s2341 = scalar_lea.vmem %s1, 64
      %v2342 = vld [vmem:[%s2341] sm:$0xf]
      %v2343 = vld [vmem:[%s2341 + $0x4] sm:$0xf]
      %v2361 = vunpack.c.l.b16 %v2324
      %v2362 = vunpack.c.l.b16 %v2325
      %v2363 = vunpack.c.l.b16 %v2326
      %v2364 = vunpack.c.l.b16 %v2327
      %v2365 = vunpack.c.l.b16 %v2328
      %v2366 = vunpack.c.l.b16 %v2329
      %v2367 = vunpack.c.l.b16 %v2330
      %v2368 = vunpack.c.l.b16 %v2331
      %v2369 = vunpack.c.l.b16 %v2332
      %v2370 = vunpack.c.l.b16 %v2333
      %v2371 = vunpack.c.l.b16 %v2334
      %v2372 = vunpack.c.l.b16 %v2335
      %v2373 = vunpack.c.l.b16 %v2336
      %v2374 = vunpack.c.l.b16 %v2337
      %v2375 = vunpack.c.l.b16 %v2338
      %v2376 = vunpack.c.l.b16 %v2339
      %v2377 = vunpack.c.l.b16 %v2340
      %v2378 = vpack.c.b16 %v2362, %v2361
      %v2379 = vpack.c.b16 %v2364, %v2363
      %v2380 = vpack.c.b16 %v2366, %v2365
      %v2381 = vpack.c.b16 %v2368, %v2367
      %v2382 = vpack.c.b16 %v2370, %v2369
      %v2383 = vpack.c.b16 %v2372, %v2371
      %v2384 = vpack.c.b16 %v2374, %v2373
      %v2385 = vpack.c.b16 %v2376, %v2375
      %v2386 = vpack.c.b16 %v2377, %v2377
      %v2387 = vrot.slane %v2378, 1
      %v2388 = vrot.slane %v2379, 1
      %v2389 = vsel %vm796, %v2387, %v2388
      %v2390 = vrot.slane %v2380, 1
      %v2391 = vsel %vm796, %v2388, %v2390
      %v2392 = vrot.slane %v2381, 1
      %v2393 = vsel %vm796, %v2390, %v2392
      %v2394 = vrot.slane %v2382, 1
      %v2395 = vsel %vm796, %v2392, %v2394
      %v2396 = vrot.slane %v2383, 1
      %v2397 = vsel %vm796, %v2394, %v2396
      %v2398 = vrot.slane %v2384, 1
      %v2399 = vsel %vm796, %v2396, %v2398
      %v2400 = vrot.slane %v2385, 1
      %v2401 = vsel %vm796, %v2398, %v2400
      %v2402 = vrot.slane %v2386, 1
      %v2403 = vsel %vm796, %v2400, %v2402
      %v2406 = vunpack.c.l.b16 %v2342
      %v2407 = vunpack.c.l.b16 %v2343
      %v2408 = vpack.c.b16 %v2407, %v2406
      %v2411 = vsel %vm272, %v2389, 0
      %v2414 = vsel %vm272, %v2391, 0
      %v2417 = vsel %vm272, %v2393, 0
      %v2420 = vsel %vm272, %v2395, 0
      %v2423 = vsel %vm272, %v2397, 0
      %v2426 = vsel %vm272, %v2399, 0
      %v2429 = vsel %vm272, %v2401, 0
      %v2432 = vsel %vm272, %v2403, 0
      %2434 = vmatprep.subr.bf16.mxu0 0
      %2435 = vmatpush1.bf16.msra.mxu0 0
      %2436 = vmatprep.subr.bf16.mxu0 0
      %2437 = vmatpush1.bf16.msra.mxu0 0
      %2438 = vmatprep.subr.bf16.mxu0 0
      %2439 = vmatpush1.bf16.msra.mxu0 0
      %2440 = vmatprep.subr.bf16.mxu0 0
      %2441 = vmatpush1.bf16.msra.mxu0 0
      %2442 = vmatprep.subr.bf16.mxu0 0
      %2443 = vmatpush1.bf16.msra.mxu0 0
      %2444 = vmatprep.subr.bf16.mxu0 0
      %2445 = vmatpush1.bf16.msra.mxu0 0
      %2446 = vmatprep.subr.bf16.mxu0 0
      %2447 = vmatpush1.bf16.msra.mxu0 0
      %2448 = vmatprep.subr.bf16.mxu0 0
      %2449 = vmatpush1.bf16.msra.mxu0 %v2408
      %2450 = vmatprep.subr.bf16.mxu0 0
      %2451 = vmatpush2.bf16.msra.mxu0 0
      %2452 = vmatprep.subr.bf16.mxu0 0
      %2453 = vmatpush2.bf16.msra.mxu0 0
      %2454 = vmatprep.subr.bf16.mxu0 0
      %2455 = vmatpush2.bf16.msra.mxu0 0
      %2456 = vmatprep.subr.bf16.mxu0 0
      %2457 = vmatpush2.bf16.msra.mxu0 0
      %2458 = vmatprep.subr.bf16.mxu0 0
      %2459 = vmatpush2.bf16.msra.mxu0 0
      %2460 = vmatprep.subr.bf16.mxu0 0
      %2461 = vmatpush2.bf16.msra.mxu0 0
      %2462 = vmatprep.subr.bf16.mxu0 0
      %2463 = vmatpush2.bf16.msra.mxu0 0
      %2464 = vmatprep.subr.bf16.mxu0 0
      %2465 = vmatpush2.bf16.msra.mxu0 0
      %2466 = vmatprep.mubr.bf16.mxu0 0
      %2467 = vmatmul.mubr.bf16.gmra.mxu0 %v2411
      %v2468 = vpop.f32.mrf.mxu0
      %v2469 = vadd.f32 0.0, %v2468
      %v2470 = vpop.f32.mrf.mxu0
      %v2471 = vpop.f32.mrf.mxu0
      %v2472 = vadd.f32 0.0, %v2471
      %v2473 = vpop.f32.mrf.mxu0
      %2474 = vmatprep.mubr.bf16.mxu0 0
      %2475 = vmatmul.mubr.bf16.gmra.mxu0 %v2414
      %v2476 = vpop.f32.mrf.mxu0
      %v2477 = vadd.f32 0.0, %v2476
      %v2478 = vpop.f32.mrf.mxu0
      %v2479 = vpop.f32.mrf.mxu0
      %v2480 = vadd.f32 0.0, %v2479
      %v2481 = vpop.f32.mrf.mxu0
      %2482 = vmatprep.mubr.bf16.mxu0 0
      %2483 = vmatmul.mubr.bf16.gmra.mxu0 %v2417
      %v2484 = vpop.f32.mrf.mxu0
      %v2485 = vadd.f32 0.0, %v2484
      %v2486 = vpop.f32.mrf.mxu0
      %v2487 = vpop.f32.mrf.mxu0
      %v2488 = vadd.f32 0.0, %v2487
      %v2489 = vpop.f32.mrf.mxu0
      %2490 = vmatprep.mubr.bf16.mxu0 0
      %2491 = vmatmul.mubr.bf16.gmra.mxu0 %v2420
      %v2492 = vpop.f32.mrf.mxu0
      %v2493 = vadd.f32 0.0, %v2492
      %v2494 = vpop.f32.mrf.mxu0
      %v2495 = vpop.f32.mrf.mxu0
      %v2496 = vadd.f32 0.0, %v2495
      %v2497 = vpop.f32.mrf.mxu0
      %2498 = vmatprep.mubr.bf16.mxu0 0
      %2499 = vmatmul.mubr.bf16.gmra.mxu0 %v2423
      %v2500 = vpop.f32.mrf.mxu0
      %v2501 = vadd.f32 0.0, %v2500
      %v2502 = vpop.f32.mrf.mxu0
      %v2503 = vpop.f32.mrf.mxu0
      %v2504 = vadd.f32 0.0, %v2503
      %v2505 = vpop.f32.mrf.mxu0
      %2506 = vmatprep.mubr.bf16.mxu0 0
      %2507 = vmatmul.mubr.bf16.gmra.mxu0 %v2426
      %v2508 = vpop.f32.mrf.mxu0
      %v2509 = vadd.f32 0.0, %v2508
      %v2510 = vpop.f32.mrf.mxu0
      %v2511 = vpop.f32.mrf.mxu0
      %v2512 = vadd.f32 0.0, %v2511
      %v2513 = vpop.f32.mrf.mxu0
      %2514 = vmatprep.mubr.bf16.mxu0 0
      %2515 = vmatmul.mubr.bf16.gmra.mxu0 %v2429
      %v2516 = vpop.f32.mrf.mxu0
      %v2517 = vadd.f32 0.0, %v2516
      %v2518 = vpop.f32.mrf.mxu0
      %v2519 = vpop.f32.mrf.mxu0
      %v2520 = vadd.f32 0.0, %v2519
      %v2521 = vpop.f32.mrf.mxu0
      %2522 = vmatprep.mubr.bf16.mxu0 0
      %2523 = vmatmul.mubr.bf16.gmra.mxu0 %v2432
      %v2524 = vpop.f32.mrf.mxu0
      %v2525 = vadd.f32 0.0, %v2524
      %v2526 = vpop.f32.mrf.mxu0
      %v2527 = vpop.f32.mrf.mxu0
      %v2528 = vadd.f32 0.0, %v2527
      %v2529 = vpop.f32.mrf.mxu0
      %2530 = vdwg.mxu0
      %v2531 = vadd.f32 %v2308, %v2469
      %v2532 = vadd.f32 %v2309, %v2472
      %v2533 = vadd.f32 %v2310, %v2477
      %v2534 = vadd.f32 %v2311, %v2480
      %v2535 = vadd.f32 %v2312, %v2485
      %v2536 = vadd.f32 %v2313, %v2488
      %v2537 = vadd.f32 %v2314, %v2493
      %v2538 = vadd.f32 %v2315, %v2496
      %v2539 = vadd.f32 %v2316, %v2501
      %v2540 = vadd.f32 %v2317, %v2504
      %v2541 = vadd.f32 %v2318, %v2509
      %v2542 = vadd.f32 %v2319, %v2512
      %v2543 = vadd.f32 %v2320, %v2517
      %v2544 = vadd.f32 %v2321, %v2520
      %v2545 = vadd.f32 %v2322, %v2525
      %v2546 = vadd.f32 %v2323, %v2528
      %2547 = vst [vmem:[#allocation2] sm:$0xff] %v2531
      %2548 = vst [vmem:[#allocation2 + $0x8] sm:$0xff] %v2532
      %2549 = vst [vmem:[#allocation2 + $0x10] sm:$0xff] %v2533
      %2550 = vst [vmem:[#allocation2 + $0x18] sm:$0xff] %v2534
      %2551 = vst [vmem:[#allocation2 + $0x20] sm:$0xff] %v2535
      %2552 = vst [vmem:[#allocation2 + $0x28] sm:$0xff] %v2536
      %2553 = vst [vmem:[#allocation2 + $0x30] sm:$0xff] %v2537
      %2554 = vst [vmem:[#allocation2 + $0x38] sm:$0xff] %v2538
      %2555 = vst [vmem:[#allocation2 + $0x40] sm:$0xff] %v2539
      %2556 = vst [vmem:[#allocation2 + $0x48] sm:$0xff] %v2540
      %2557 = vst [vmem:[#allocation2 + $0x50] sm:$0xff] %v2541
      %2558 = vst [vmem:[#allocation2 + $0x58] sm:$0xff] %v2542
      %2559 = vst [vmem:[#allocation2 + $0x60] sm:$0xff] %v2543
      %2560 = vst [vmem:[#allocation2 + $0x68] sm:$0xff] %v2544
      %2561 = vst [vmem:[#allocation2 + $0x70] sm:$0xff] %v2545
      %2562 = vst [vmem:[#allocation2 + $0x78] sm:$0xff] %v2546
      %v2563 = vld [vmem:[#allocation2] sm:$0xff]
      %v2564 = vld [vmem:[#allocation2 + $0x8] sm:$0xff]
      %v2565 = vld [vmem:[#allocation2 + $0x10] sm:$0xff]
      %v2566 = vld [vmem:[#allocation2 + $0x18] sm:$0xff]
      %v2567 = vld [vmem:[#allocation2 + $0x20] sm:$0xff]
      %v2568 = vld [vmem:[#allocation2 + $0x28] sm:$0xff]
      %v2569 = vld [vmem:[#allocation2 + $0x30] sm:$0xff]
      %v2570 = vld [vmem:[#allocation2 + $0x38] sm:$0xff]
      %v2571 = vld [vmem:[#allocation2 + $0x40] sm:$0xff]
      %v2572 = vld [vmem:[#allocation2 + $0x48] sm:$0xff]
      %v2573 = vld [vmem:[#allocation2 + $0x50] sm:$0xff]
      %v2574 = vld [vmem:[#allocation2 + $0x58] sm:$0xff]
      %v2575 = vld [vmem:[#allocation2 + $0x60] sm:$0xff]
      %v2576 = vld [vmem:[#allocation2 + $0x68] sm:$0xff]
      %v2577 = vld [vmem:[#allocation2 + $0x70] sm:$0xff]
      %v2578 = vld [vmem:[#allocation2 + $0x78] sm:$0xff]
      %v2579 = vld [vmem:[%s2] sm:$0x1]
      %v2581 = vlaneseq
      %v2582 = vshrl.u32 %v2581, 7
      %v2583 = vsub.s32 0, %v2582
      %v2584 = vrot.slane %v2579, %v2583
      %v2586 = vadd.f32 %v2563, %v2584
      %v2587 = vadd.f32 %v2564, %v2584
      %v2588 = vadd.f32 %v2565, %v2584
      %v2589 = vadd.f32 %v2566, %v2584
      %v2590 = vadd.f32 %v2567, %v2584
      %v2591 = vadd.f32 %v2568, %v2584
      %v2592 = vadd.f32 %v2569, %v2584
      %v2593 = vadd.f32 %v2570, %v2584
      %v2594 = vadd.f32 %v2571, %v2584
      %v2595 = vadd.f32 %v2572, %v2584
      %v2596 = vadd.f32 %v2573, %v2584
      %v2597 = vadd.f32 %v2574, %v2584
      %v2598 = vadd.f32 %v2575, %v2584
      %v2599 = vadd.f32 %v2576, %v2584
      %v2600 = vadd.f32 %v2577, %v2584
      %v2601 = vadd.f32 %v2578, %v2584
      %v2602 = vxor.u32 %v2586, 2147483648
      %v2603 = vxor.u32 %v2587, 2147483648
      %v2604 = vxor.u32 %v2588, 2147483648
      %v2605 = vxor.u32 %v2589, 2147483648
      %v2606 = vxor.u32 %v2590, 2147483648
      %v2607 = vxor.u32 %v2591, 2147483648
      %v2608 = vxor.u32 %v2592, 2147483648
      %v2609 = vxor.u32 %v2593, 2147483648
      %v2610 = vxor.u32 %v2594, 2147483648
      %v2611 = vxor.u32 %v2595, 2147483648
      %v2612 = vxor.u32 %v2596, 2147483648
      %v2613 = vxor.u32 %v2597, 2147483648
      %v2614 = vxor.u32 %v2598, 2147483648
      %v2615 = vxor.u32 %v2599, 2147483648
      %v2616 = vxor.u32 %v2600, 2147483648
      %v2617 = vxor.u32 %v2601, 2147483648
      %v2618 = vmul.f32 %v2602, 1.442695
      %v2619 = vpow.pop %v2618
      %v2620 = vmul.f32 %v2603, 1.442695
      %v2621 = vpow.pop %v2620
      %v2622 = vmul.f32 %v2604, 1.442695
      %v2623 = vpow.pop %v2622
      %v2624 = vmul.f32 %v2605, 1.442695
      %v2625 = vpow.pop %v2624
      %v2626 = vmul.f32 %v2606, 1.442695
      %v2627 = vpow.pop %v2626
      %v2628 = vmul.f32 %v2607, 1.442695
      %v2629 = vpow.pop %v2628
      %v2630 = vmul.f32 %v2608, 1.442695
      %v2631 = vpow.pop %v2630
      %v2632 = vmul.f32 %v2609, 1.442695
      %v2633 = vpow.pop %v2632
      %v2634 = vmul.f32 %v2610, 1.442695
      %v2635 = vpow.pop %v2634
      %v2636 = vmul.f32 %v2611, 1.442695
      %v2637 = vpow.pop %v2636
      %v2638 = vmul.f32 %v2612, 1.442695
      %v2639 = vpow.pop %v2638
      %v2640 = vmul.f32 %v2613, 1.442695
      %v2641 = vpow.pop %v2640
      %v2642 = vmul.f32 %v2614, 1.442695
      %v2643 = vpow.pop %v2642
      %v2644 = vmul.f32 %v2615, 1.442695
      %v2645 = vpow.pop %v2644
      %v2646 = vmul.f32 %v2616, 1.442695
      %v2647 = vpow.pop %v2646
      %v2648 = vmul.f32 %v2617, 1.442695
      %v2649 = vpow.pop %v2648
      %v2650 = vadd.f32 %v2619, 1.0
      %v2651 = vadd.f32 %v2621, 1.0
      %v2652 = vadd.f32 %v2623, 1.0
      %v2653 = vadd.f32 %v2625, 1.0
      %v2654 = vadd.f32 %v2627, 1.0
      %v2655 = vadd.f32 %v2629, 1.0
      %v2656 = vadd.f32 %v2631, 1.0
      %v2657 = vadd.f32 %v2633, 1.0
      %v2658 = vadd.f32 %v2635, 1.0
      %v2659 = vadd.f32 %v2637, 1.0
      %v2660 = vadd.f32 %v2639, 1.0
      %v2661 = vadd.f32 %v2641, 1.0
      %v2662 = vadd.f32 %v2643, 1.0
      %v2663 = vadd.f32 %v2645, 1.0
      %v2664 = vadd.f32 %v2647, 1.0
      %v2665 = vadd.f32 %v2649, 1.0
      %v2666 = vrcp.pop %v2650
      %v2667 = vmul.f32 1.0, %v2666
      %v2668 = vrcp.pop %v2651
      %v2669 = vmul.f32 1.0, %v2668
      %v2670 = vrcp.pop %v2652
      %v2671 = vmul.f32 1.0, %v2670
      %v2672 = vrcp.pop %v2653
      %v2673 = vmul.f32 1.0, %v2672
      %v2674 = vrcp.pop %v2654
      %v2675 = vmul.f32 1.0, %v2674
      %v2676 = vrcp.pop %v2655
      %v2677 = vmul.f32 1.0, %v2676
      %v2678 = vrcp.pop %v2656
      %v2679 = vmul.f32 1.0, %v2678
      %v2680 = vrcp.pop %v2657
      %v2681 = vmul.f32 1.0, %v2680
      %v2682 = vrcp.pop %v2658
      %v2683 = vmul.f32 1.0, %v2682
      %v2684 = vrcp.pop %v2659
      %v2685 = vmul.f32 1.0, %v2684
      %v2686 = vrcp.pop %v2660
      %v2687 = vmul.f32 1.0, %v2686
      %v2688 = vrcp.pop %v2661
      %v2689 = vmul.f32 1.0, %v2688
      %v2690 = vrcp.pop %v2662
      %v2691 = vmul.f32 1.0, %v2690
      %v2692 = vrcp.pop %v2663
      %v2693 = vmul.f32 1.0, %v2692
      %v2694 = vrcp.pop %v2664
      %v2695 = vmul.f32 1.0, %v2694
      %v2696 = vrcp.pop %v2665
      %v2697 = vmul.f32 1.0, %v2696
      %v2698 = vmul.f32 %v2586, %v2667
      %v2699 = vmul.f32 %v2587, %v2669
      %v2700 = vmul.f32 %v2588, %v2671
      %v2701 = vmul.f32 %v2589, %v2673
      %v2702 = vmul.f32 %v2590, %v2675
      %v2703 = vmul.f32 %v2591, %v2677
      %v2704 = vmul.f32 %v2592, %v2679
      %v2705 = vmul.f32 %v2593, %v2681
      %v2706 = vmul.f32 %v2594, %v2683
      %v2707 = vmul.f32 %v2595, %v2685
      %v2708 = vmul.f32 %v2596, %v2687
      %v2709 = vmul.f32 %v2597, %v2689
      %v2710 = vmul.f32 %v2598, %v2691
      %v2711 = vmul.f32 %v2599, %v2693
      %v2712 = vmul.f32 %v2600, %v2695
      %v2713 = vmul.f32 %v2601, %v2697
      %v2714 = vpack.c.bf16 %v2699, %v2698
      %v2715 = vpack.c.bf16 %v2701, %v2700
      %v2716 = vpack.c.bf16 %v2703, %v2702
      %v2717 = vpack.c.bf16 %v2705, %v2704
      %v2718 = vpack.c.bf16 %v2707, %v2706
      %v2719 = vpack.c.bf16 %v2709, %v2708
      %v2720 = vpack.c.bf16 %v2711, %v2710
      %v2721 = vpack.c.bf16 %v2713, %v2712
      %v2730 = vunpack.c.l.b16 %v2714
      %v2731 = vunpack.c.h.b16 %v2714
      %v2732 = vunpack.c.l.b16 %v2715
      %v2733 = vunpack.c.h.b16 %v2715
      %v2734 = vunpack.c.l.b16 %v2716
      %v2735 = vunpack.c.h.b16 %v2716
      %v2736 = vunpack.c.l.b16 %v2717
      %v2737 = vunpack.c.h.b16 %v2717
      %v2738 = vunpack.c.l.b16 %v2718
      %v2739 = vunpack.c.h.b16 %v2718
      %v2740 = vunpack.c.l.b16 %v2719
      %v2741 = vunpack.c.h.b16 %v2719
      %v2742 = vunpack.c.l.b16 %v2720
      %v2743 = vunpack.c.h.b16 %v2720
      %v2744 = vunpack.c.l.b16 %v2721
      %v2745 = vunpack.c.h.b16 %v2721
      %v2746 = vpack.c.b16 %v2730, %v2730
      %v2747 = vpack.c.b16 %v2731, %v2731
      %v2748 = vpack.c.b16 %v2732, %v2732
      %v2749 = vpack.c.b16 %v2733, %v2733
      %v2750 = vpack.c.b16 %v2734, %v2734
      %v2751 = vpack.c.b16 %v2735, %v2735
      %v2752 = vpack.c.b16 %v2736, %v2736
      %v2753 = vpack.c.b16 %v2737, %v2737
      %v2754 = vpack.c.b16 %v2738, %v2738
      %v2755 = vpack.c.b16 %v2739, %v2739
      %v2756 = vpack.c.b16 %v2740, %v2740
      %v2757 = vpack.c.b16 %v2741, %v2741
      %v2758 = vpack.c.b16 %v2742, %v2742
      %v2759 = vpack.c.b16 %v2743, %v2743
      %v2760 = vpack.c.b16 %v2744, %v2744
      %v2761 = vpack.c.b16 %v2745, %v2745
      %2778 = vst [vmem:[%s206] sm:$0xf] %v2746
      %2779 = vst [vmem:[%s206 + $0x4] sm:$0xf] %v2747
      %2780 = vst [vmem:[%s206 + $0x8] sm:$0xf] %v2748
      %2781 = vst [vmem:[%s206 + $0xc] sm:$0xf] %v2749
      %2782 = vst [vmem:[%s206 + $0x10] sm:$0xf] %v2750
      %2783 = vst [vmem:[%s206 + $0x14] sm:$0xf] %v2751
      %2784 = vst [vmem:[%s206 + $0x18] sm:$0xf] %v2752
      %2785 = vst [vmem:[%s206 + $0x1c] sm:$0xf] %v2753
      %2786 = vst [vmem:[%s206 + $0x20] sm:$0xf] %v2754
      %2787 = vst [vmem:[%s206 + $0x24] sm:$0xf] %v2755
      %2788 = vst [vmem:[%s206 + $0x28] sm:$0xf] %v2756
      %2789 = vst [vmem:[%s206 + $0x2c] sm:$0xf] %v2757
      %2790 = vst [vmem:[%s206 + $0x30] sm:$0xf] %v2758
      %2791 = vst [vmem:[%s206 + $0x34] sm:$0xf] %v2759
      %2792 = vst [vmem:[%s206 + $0x38] sm:$0xf] %v2760
      %2793 = vst [vmem:[%s206 + $0x3c] sm:$0xf] %v2761
      %p2794 = scmp.lt.s32.totalorder %s18, 1
      %s2795 = scalar_select %p2794, %s18, 1
      %p2796 = scmp.lt.s32.totalorder %s19, 0
      %s2797 = scalar_select %p2796, %s19, 0
      %s2798 = smul.addr %s2797, 16
      %s2799 = smul.addr %s2795, 16
      %s2800 = sadd.s32 %s2798, %s2799
      %s2801 = smul.addr %s2800, 4
      %s2802 = scalar_lea.vmem %s3, %s2801
      // Predicated region
      $region33: #{spdconv1_forward.1} parent=31 // pred_check
        %p2803 = pneg %p116
      $region34: #{spdconv1_forward.1} parent=31 // pred_check_branch
        %2805 = sbr.rel (%p2803) target = $region36
      $region35: #{spdconv1_forward.1} parent=31 // pred_region
        _
      $region36: #{spdconv1_forward.1} parent=31 // pred_fallthru
        _
    $region32: #{spdconv1_forward.1} parent=5 // pred_fallthru
      _
    %p2806 = scmp.le.s32.totalorder 2, %s9
    // Predicated region
    $region37: #{spdconv1_forward.1} parent=5 // pred_check
      %p2807 = pneg %p2806
    $region38: #{spdconv1_forward.1} parent=5 // pred_check_branch
      %2809 = sbr.rel (%p2807) target = $region40
    $region39: #{spdconv1_forward.1} parent=5 // pred_region
      %s2810 = ssub.s32 %s9, 2
      // Predicated region
      $region41: #{spdconv1_forward.1} parent=39 // pred_check
        %p2811 = pneg %p122
      $region42: #{spdconv1_forward.1} parent=39 // pred_check_branch
        %2813 = sbr.rel (%p2811) target = $region44
      $region43: #{spdconv1_forward.1} parent=39 // pred_region
        %p2814 = scmp.lt.s32.totalorder %s20, 1
        %s2815 = scalar_select %p2814, %s20, 1
        %p2816 = scmp.lt.s32.totalorder %s21, 0
        %s2817 = scalar_select %p2816, %s21, 0
        %s2818 = smul.addr %s2817, 16
        %s2819 = smul.addr %s2815, 16
        %s2820 = sadd.s32 %s2818, %s2819
        %s2821 = smul.addr %s2820, 4
        %s2822 = scalar_lea.vmem %s3, %s2821
      $region44: #{spdconv1_forward.1} parent=39 // pred_fallthru
        _
    $region40: #{spdconv1_forward.1} parent=5 // pred_fallthru
      _
  $region6: #{spdconv1_forward.1} parent=0 // loop_footer
    %s13 = sadd.s32 1, %s9
  $region7: #{spdconv1_forward.1} parent=0 // loop_footer_branch
    %8 = sbr.rel target = $region3
  $region8: #{spdconv1_forward.1} parent=0 // loop_exit
    _

</llo_original>
